<compile_context>
chip_gen: v7x
topology: tpu7x:2x2x1
jax: 0.10.0
libtpu: 0.0.40
codegen_flags: <defaults>
</compile_context>

<pallas_src>
import functools

import jax
import jax.numpy as jnp
from jax.experimental import pallas as pl
from jax.experimental.pallas import tpu as pltpu


def multitask_head_kernel(xm_ref, xh_ref, w1_ref, b1_ref, w2_ref, b2_ref,
                          o_ref, xcat_ref, *, shifts):
    # xm_ref  : (1, C, TL)      main flattened-padded-spatial tile
    # xh_ref  : (1, C, HALO)    halo (next HALO elements of the same array)
    # w1_ref  : (9, 3m, C)      per-tap 3x3 weights of the 3 fused heads
    # b1_ref  : (3m, 1)
    # w2_ref  : (NC, 3m)        block-diagonal fused 1x1 weights
    # b2_ref  : (NC, 1)
    # o_ref   : (1, NC, TL)
    # xcat_ref: (C, TL + HALO)  VMEM scratch: tile + halo, contiguous
    tl = xm_ref.shape[2]
    halo = xh_ref.shape[2]

    # Stitch main tile and halo into one contiguous VMEM buffer (aligned stores).
    xcat_ref[:, 0:tl] = xm_ref[0]
    xcat_ref[:, tl:tl + halo] = xh_ref[0]

    # 3x3 conv == sum over 9 constant lane-shifted GEMMs (K = C), f32 accumulate.
    acc = None
    for tap, s in enumerate(shifts):
        xs = xcat_ref[:, pl.ds(s, tl)]                       # (C, TL)
        d = jnp.dot(w1_ref[tap], xs,
                    preferred_element_type=jnp.float32)      # (3m, TL) f32
        acc = d if acc is None else acc + d

    h = jnp.maximum(acc + b1_ref[...], 0.0)                  # bias + ReLU
    h = h.astype(w2_ref.dtype)
    out = jnp.dot(w2_ref[...], h,
                  preferred_element_type=jnp.float32)        # (NC, TL) f32
    out = out + b2_ref[...]
    o_ref[0] = out.astype(o_ref.dtype)


def multitask_head_forward(x_nchw, w1_taps, b1_col, w2_t, b2_col, *,
                           tile_l=4096, compute_dtype=jnp.bfloat16):
    N, C, H, W = x_nchw.shape
    Hp, Wp = H + 2, W + 2
    n_taps, M3, Cw = w1_taps.shape
    NC = w2_t.shape[0]
    assert n_taps == 9 and Cw == C

    # Flattened-padded-spatial geometry.  Output position q = y*Wp + x; the
    # tap (dy, dx) reads q + dy*Wp + dx of the same flattened padded image.
    shifts = tuple(dy * Wp + dx for dy in range(3) for dx in range(3))
    s_max = shifts[-1]                                   # 2*Wp + 2
    halo = pl.cdiv(s_max, 128) * 128                     # halo lanes (>= s_max)
    l_valid = H * Wp                                     # positions we keep
    tl = min(tile_l, l_valid)
    tl = pl.cdiv(max(tl, 1), halo) * halo                # multiple of HALO (& 128)
    num_tiles = pl.cdiv(l_valid, tl)
    l_main = num_tiles * tl
    l_total = l_main + halo                              # so the last halo exists
    kf = tl // halo                                      # halo blocks per tile

    # --- glue: single zero pad (no 9x im2col inflation), flatten, tail pad ---
    xp = jnp.pad(x_nchw, ((0, 0), (0, 0), (1, 1), (1, 1)))
    xflat = xp.reshape(N, C, Hp * Wp)
    xflat = jnp.pad(xflat, ((0, 0), (0, 0), (0, l_total - Hp * Wp)))
    xflat = xflat.astype(compute_dtype)

    w1c = w1_taps.astype(compute_dtype)
    w2c = w2_t.astype(compute_dtype)
    b1c = b1_col.astype(jnp.float32)
    b2c = b2_col.astype(jnp.float32)

    # --- VMEM budget (double-buffered IO + resident weights + scratch) ---
    cd = jnp.dtype(compute_dtype).itemsize
    od = jnp.dtype(x_nchw.dtype).itemsize
    per_in = (C * tl + C * halo) * cd
    per_out = NC * tl * od
    resident = (9 * M3 * C + NC * M3) * cd + (M3 + NC) * 4
    scratch = C * (tl + halo) * cd
    interm = M3 * tl * 4 + NC * tl * 4 + C * tl * cd
    vmem_need = 2 * per_in + 2 * per_out + resident + scratch + interm
    vmem_limit = int(min(64 * 1024 * 1024, max(32 * 1024 * 1024, 2 * vmem_need)))

    flops = 2 * N * l_main * (9 * C * M3 + M3 * NC)
    bytes_accessed = (N * num_tiles * C * (tl + halo) * cd
                      + resident
                      + N * NC * l_main * od)

    out_flat = pl.pallas_call(
        functools.partial(multitask_head_kernel, shifts=shifts),
        out_shape=jax.ShapeDtypeStruct((N, NC, l_main), x_nchw.dtype),
        grid=(N, num_tiles),
        in_specs=[
            pl.BlockSpec((1, C, tl), lambda n, t: (n, 0, t)),
            pl.BlockSpec((1, C, halo), lambda n, t: (n, 0, (t + 1) * kf)),
            pl.BlockSpec((9, M3, C), lambda n, t: (0, 0, 0)),   # VMEM-resident
            pl.BlockSpec((M3, 1), lambda n, t: (0, 0)),
            pl.BlockSpec((NC, M3), lambda n, t: (0, 0)),
            pl.BlockSpec((NC, 1), lambda n, t: (0, 0)),
        ],
        out_specs=pl.BlockSpec((1, NC, tl), lambda n, t: (n, 0, t)),
        scratch_shapes=[pltpu.VMEM((C, tl + halo), compute_dtype)],
        compiler_params=pltpu.CompilerParams(
            dimension_semantics=("parallel", "parallel"),
            vmem_limit_bytes=vmem_limit),
        cost_estimate=pl.CostEstimate(flops=int(flops), transcendentals=0,
                                      bytes_accessed=int(bytes_accessed)),
    )(xflat, xflat, w1c, b1c, w2c, b2c)

    # Drop garbage columns (padded row stride) and the tail padding.
    out = out_flat[:, :, :H * Wp].reshape(N, NC, H, Wp)[:, :, :, :W]
    return out


def init_params(key, input_channels):
    """Deterministic synthetic params with the same shapes as the nn.Module."""
    m = input_channels // 4
    out_channels = [2, 1, 2]            # sum([[2], [1], [2]], [])
    params = []
    keys = jax.random.split(key, 4 * len(out_channels))
    for i, oc in enumerate(out_channels):
        k1, k2, k3, k4 = keys[4 * i:4 * i + 4]
        w1 = 0.1 * jax.random.normal(k1, (m, input_channels, 3, 3), jnp.float32)
        b1 = 0.1 * jax.random.normal(k2, (m,), jnp.float32)
        w2 = 0.1 * jax.random.normal(k3, (oc, m, 1, 1), jnp.float32)
        b2 = 0.1 * jax.random.normal(k4, (oc,), jnp.float32)
        params.append((w1, b1, w2, b2))
    return params, m, sum(out_channels)


def pack_params(params, input_channels):
    """Fuse the 3 heads into the GEMM operands the kernel consumes."""
    m = params[0][0].shape[0]
    heads = len(params)
    num_class = sum(p[2].shape[0] for p in params)

    w1_all = jnp.concatenate([p[0] for p in params], axis=0)       # (3m, C, 3, 3)
    b1_all = jnp.concatenate([p[1] for p in params], axis=0)       # (3m,)
    # (O, C, KH, KW) -> (KH, KW, O, C) -> (9, 3m, C): tap-major (dy major, dx
    # minor), matching shift = dy*Wp + dx inside the kernel.
    w1_taps = jnp.transpose(w1_all, (2, 3, 0, 1)).reshape(9, heads * m,
                                                          input_channels)

    w2_t = jnp.zeros((num_class, heads * m), jnp.float32)          # block-diagonal
    b2_all = jnp.concatenate([p[3] for p in params], axis=0)       # (NC,)
    off = 0
    for i, (_, _, w2, _) in enumerate(params):
        oc = w2.shape[0]
        w2_t = w2_t.at[off:off + oc, i * m:(i + 1) * m].set(w2[:, :, 0, 0])
        off += oc
    return w1_taps, b1_all.reshape(-1, 1), w2_t, b2_all.reshape(-1, 1)


def ref_forward(x_nchw, params):
    """Pure-JAX reference reproducing the PyTorch forward."""
    outs = []
    dn = ('NCHW', 'OIHW', 'NCHW')
    for (w1, b1, w2, b2) in params:
        h = jax.lax.conv_general_dilated(x_nchw, w1, (1, 1), 'SAME',
                                         dimension_numbers=dn)
        h = jnp.maximum(h + b1[None, :, None, None], 0.0)
        o = jax.lax.conv_general_dilated(h, w2, (1, 1), 'SAME',
                                         dimension_numbers=dn)
        outs.append(o + b2[None, :, None, None])
    return jnp.concatenate(outs, axis=1)


if __name__ == "__main__":
    key = jax.random.PRNGKey(0)
    kx, kp = jax.random.split(key)

    N, C, H, W = 2, 32, 16, 16          # input_channels=32 -> m=8, num_class=5
    x = jax.random.normal(kx, (N, C, H, W), jnp.float32)

    params, m, num_class = init_params(kp, C)
    w1_taps, b1_col, w2_t, b2_col = pack_params(params, C)
    ref = ref_forward(x, params)

    # f32 compute path: tight check against the conv reference.
    out_f32 = multitask_head_forward(x, w1_taps, b1_col, w2_t, b2_col,
                                     compute_dtype=jnp.float32)
    out_f32 = jax.block_until_ready(out_f32)
    assert out_f32.shape == (N, num_class, H, W), out_f32.shape
    assert jnp.allclose(out_f32, ref, atol=1e-4, rtol=1e-4), \
        float(jnp.max(jnp.abs(out_f32 - ref)))

    # bf16 fast path (production default): f32 accumulation, looser tolerance.
    out_bf16 = multitask_head_forward(x, w1_taps, b1_col, w2_t, b2_col,
                                      compute_dtype=jnp.bfloat16)
    out_bf16 = jax.block_until_ready(out_bf16)
    assert out_bf16.shape == (N, num_class, H, W), out_bf16.shape
    assert jnp.allclose(out_bf16, ref, atol=5e-2, rtol=5e-2), \
        float(jnp.max(jnp.abs(out_bf16 - ref)))

    print("KERNEL_OK")
</pallas_src>

<mosaic_0001>
module attributes {stable_mosaic.version = 11 : i64} {
  func.func @multitask_head_kernel(%arg0: i32, %arg1: i32, %arg2: memref<1x32x384xf32, #tpu.memory_space<vmem>>, %arg3: memref<1x32x128xf32, #tpu.memory_space<vmem>>, %arg4: memref<9x24x32xf32, #tpu.memory_space<vmem>>, %arg5: memref<24x1xf32, #tpu.memory_space<vmem>>, %arg6: memref<5x24xf32, #tpu.memory_space<vmem>>, %arg7: memref<5x1xf32, #tpu.memory_space<vmem>>, %arg8: memref<1x5x384xf32, #tpu.memory_space<vmem>>, %arg9: memref<32x512xf32, #tpu.memory_space<vmem>>) attributes {dimension_semantics = [#tpu.dimension_semantics<parallel>, #tpu.dimension_semantics<parallel>], iteration_bounds = array<i64: 2, 1>, scalar_prefetch = 0 : i64, scratch_operands = 1 : i64, tpu.core_type = #tpu.core_type<tc>, window_params = [{transform_indices = @transform_0, window_bounds = array<i64: 1, 32, 384>}, {transform_indices = @transform_1, window_bounds = array<i64: 1, 32, 128>}, {pipeline_mode = #tpu.pipeline_mode<synchronous>, transform_indices = @transform_2, window_bounds = array<i64: 9, 24, 32>}, {pipeline_mode = #tpu.pipeline_mode<synchronous>, transform_indices = @transform_3, window_bounds = array<i64: 24, 1>}, {pipeline_mode = #tpu.pipeline_mode<synchronous>, transform_indices = @transform_4, window_bounds = array<i64: 5, 24>}, {pipeline_mode = #tpu.pipeline_mode<synchronous>, transform_indices = @transform_5, window_bounds = array<i64: 5, 1>}, {transform_indices = @transform_6, window_bounds = array<i64: 1, 5, 384>}]} {
    %c0 = arith.constant 0 : index
    %c0_0 = arith.constant 0 : index
    %c0_1 = arith.constant 0 : index
    %0 = vector.load %arg2[%c0, %c0_0, %c0_1] : memref<1x32x384xf32, #tpu.memory_space<vmem>>, vector<1x32x384xf32>
    %1 = vector.shape_cast %0 : vector<1x32x384xf32> to vector<32x384xf32>
    %c0_2 = arith.constant 0 : index
    %c0_3 = arith.constant 0 : index
    %2 = vector.load %arg9[%c0_2, %c0_3] : memref<32x512xf32, #tpu.memory_space<vmem>>, vector<32x384xf32>
    tpu.vector_store %arg9[%c0_2, %c0_3], %1 {strides = array<i32>} : memref<32x512xf32, #tpu.memory_space<vmem>>, vector<32x384xf32>,
    %c0_4 = arith.constant 0 : index
    %c0_5 = arith.constant 0 : index
    %c0_6 = arith.constant 0 : index
    %3 = vector.load %arg3[%c0_4, %c0_5, %c0_6] : memref<1x32x128xf32, #tpu.memory_space<vmem>>, vector<1x32x128xf32>
    %4 = vector.shape_cast %3 : vector<1x32x128xf32> to vector<32x128xf32>
    %c0_7 = arith.constant 0 : index
    %c384 = arith.constant 384 : index
    %5 = vector.load %arg9[%c0_7, %c384] : memref<32x512xf32, #tpu.memory_space<vmem>>, vector<32x128xf32>
    tpu.vector_store %arg9[%c0_7, %c384], %4 {strides = array<i32>} : memref<32x512xf32, #tpu.memory_space<vmem>>, vector<32x128xf32>,
    %c0_8 = arith.constant 0 : index
    %c0_9 = arith.constant 0 : index
    %6 = vector.load %arg9[%c0_8, %c0_9] : memref<32x512xf32, #tpu.memory_space<vmem>>, vector<32x384xf32>
    %c0_10 = arith.constant 0 : index
    %c0_11 = arith.constant 0 : index
    %c0_12 = arith.constant 0 : index
    %7 = vector.load %arg4[%c0_10, %c0_11, %c0_12] : memref<9x24x32xf32, #tpu.memory_space<vmem>>, vector<1x24x32xf32>
    %8 = vector.shape_cast %7 : vector<1x24x32xf32> to vector<24x32xf32>
    %cst = arith.constant dense<0.000000e+00> : vector<24x384xf32>
    %9 = tpu.matmul %8, %6, %cst {dimension_numbers = #tpu.dot_dimension_numbers<[1], [0], [0], [1], [0, 0, 1, 1], [], []>} : vector<24x32xf32>, vector<32x384xf32>, vector<24x384xf32> -> vector<24x384xf32>
    %c0_13 = arith.constant 0 : index
    %c1 = arith.constant 1 : index
    %10 = vector.load %arg9[%c0_13, %c1] : memref<32x512xf32, #tpu.memory_space<vmem>>, vector<32x384xf32>
    %c1_14 = arith.constant 1 : index
    %c0_15 = arith.constant 0 : index
    %c0_16 = arith.constant 0 : index
    %11 = vector.load %arg4[%c1_14, %c0_15, %c0_16] : memref<9x24x32xf32, #tpu.memory_space<vmem>>, vector<1x24x32xf32>
    %12 = vector.shape_cast %11 : vector<1x24x32xf32> to vector<24x32xf32>
    %cst_17 = arith.constant dense<0.000000e+00> : vector<24x384xf32>
    %13 = tpu.matmul %12, %10, %cst_17 {dimension_numbers = #tpu.dot_dimension_numbers<[1], [0], [0], [1], [0, 0, 1, 1], [], []>} : vector<24x32xf32>, vector<32x384xf32>, vector<24x384xf32> -> vector<24x384xf32>
    %14 = arith.addf %9, %13 : vector<24x384xf32>
    %c0_18 = arith.constant 0 : index
    %c2 = arith.constant 2 : index
    %15 = vector.load %arg9[%c0_18, %c2] : memref<32x512xf32, #tpu.memory_space<vmem>>, vector<32x384xf32>
    %c2_19 = arith.constant 2 : index
    %c0_20 = arith.constant 0 : index
    %c0_21 = arith.constant 0 : index
    %16 = vector.load %arg4[%c2_19, %c0_20, %c0_21] : memref<9x24x32xf32, #tpu.memory_space<vmem>>, vector<1x24x32xf32>
    %17 = vector.shape_cast %16 : vector<1x24x32xf32> to vector<24x32xf32>
    %cst_22 = arith.constant dense<0.000000e+00> : vector<24x384xf32>
    %18 = tpu.matmul %17, %15, %cst_22 {dimension_numbers = #tpu.dot_dimension_numbers<[1], [0], [0], [1], [0, 0, 1, 1], [], []>} : vector<24x32xf32>, vector<32x384xf32>, vector<24x384xf32> -> vector<24x384xf32>
    %19 = arith.addf %14, %18 : vector<24x384xf32>
    %c0_23 = arith.constant 0 : index
    %c18 = arith.constant 18 : index
    %20 = vector.load %arg9[%c0_23, %c18] : memref<32x512xf32, #tpu.memory_space<vmem>>, vector<32x384xf32>
    %c3 = arith.constant 3 : index
    %c0_24 = arith.constant 0 : index
    %c0_25 = arith.constant 0 : index
    %21 = vector.load %arg4[%c3, %c0_24, %c0_25] : memref<9x24x32xf32, #tpu.memory_space<vmem>>, vector<1x24x32xf32>
    %22 = vector.shape_cast %21 : vector<1x24x32xf32> to vector<24x32xf32>
    %cst_26 = arith.constant dense<0.000000e+00> : vector<24x384xf32>
    %23 = tpu.matmul %22, %20, %cst_26 {dimension_numbers = #tpu.dot_dimension_numbers<[1], [0], [0], [1], [0, 0, 1, 1], [], []>} : vector<24x32xf32>, vector<32x384xf32>, vector<24x384xf32> -> vector<24x384xf32>
    %24 = arith.addf %19, %23 : vector<24x384xf32>
    %c0_27 = arith.constant 0 : index
    %c19 = arith.constant 19 : index
    %25 = vector.load %arg9[%c0_27, %c19] : memref<32x512xf32, #tpu.memory_space<vmem>>, vector<32x384xf32>
    %c4 = arith.constant 4 : index
    %c0_28 = arith.constant 0 : index
    %c0_29 = arith.constant 0 : index
    %26 = vector.load %arg4[%c4, %c0_28, %c0_29] : memref<9x24x32xf32, #tpu.memory_space<vmem>>, vector<1x24x32xf32>
    %27 = vector.shape_cast %26 : vector<1x24x32xf32> to vector<24x32xf32>
    %cst_30 = arith.constant dense<0.000000e+00> : vector<24x384xf32>
    %28 = tpu.matmul %27, %25, %cst_30 {dimension_numbers = #tpu.dot_dimension_numbers<[1], [0], [0], [1], [0, 0, 1, 1], [], []>} : vector<24x32xf32>, vector<32x384xf32>, vector<24x384xf32> -> vector<24x384xf32>
    %29 = arith.addf %24, %28 : vector<24x384xf32>
    %c0_31 = arith.constant 0 : index
    %c20 = arith.constant 20 : index
    %30 = vector.load %arg9[%c0_31, %c20] : memref<32x512xf32, #tpu.memory_space<vmem>>, vector<32x384xf32>
    %c5 = arith.constant 5 : index
    %c0_32 = arith.constant 0 : index
    %c0_33 = arith.constant 0 : index
    %31 = vector.load %arg4[%c5, %c0_32, %c0_33] : memref<9x24x32xf32, #tpu.memory_space<vmem>>, vector<1x24x32xf32>
    %32 = vector.shape_cast %31 : vector<1x24x32xf32> to vector<24x32xf32>
    %cst_34 = arith.constant dense<0.000000e+00> : vector<24x384xf32>
    %33 = tpu.matmul %32, %30, %cst_34 {dimension_numbers = #tpu.dot_dimension_numbers<[1], [0], [0], [1], [0, 0, 1, 1], [], []>} : vector<24x32xf32>, vector<32x384xf32>, vector<24x384xf32> -> vector<24x384xf32>
    %34 = arith.addf %29, %33 : vector<24x384xf32>
    %c0_35 = arith.constant 0 : index
    %c36 = arith.constant 36 : index
    %35 = vector.load %arg9[%c0_35, %c36] : memref<32x512xf32, #tpu.memory_space<vmem>>, vector<32x384xf32>
    %c6 = arith.constant 6 : index
    %c0_36 = arith.constant 0 : index
    %c0_37 = arith.constant 0 : index
    %36 = vector.load %arg4[%c6, %c0_36, %c0_37] : memref<9x24x32xf32, #tpu.memory_space<vmem>>, vector<1x24x32xf32>
    %37 = vector.shape_cast %36 : vector<1x24x32xf32> to vector<24x32xf32>
    %cst_38 = arith.constant dense<0.000000e+00> : vector<24x384xf32>
    %38 = tpu.matmul %37, %35, %cst_38 {dimension_numbers = #tpu.dot_dimension_numbers<[1], [0], [0], [1], [0, 0, 1, 1], [], []>} : vector<24x32xf32>, vector<32x384xf32>, vector<24x384xf32> -> vector<24x384xf32>
    %39 = arith.addf %34, %38 : vector<24x384xf32>
    %c0_39 = arith.constant 0 : index
    %c37 = arith.constant 37 : index
    %40 = vector.load %arg9[%c0_39, %c37] : memref<32x512xf32, #tpu.memory_space<vmem>>, vector<32x384xf32>
    %c7 = arith.constant 7 : index
    %c0_40 = arith.constant 0 : index
    %c0_41 = arith.constant 0 : index
    %41 = vector.load %arg4[%c7, %c0_40, %c0_41] : memref<9x24x32xf32, #tpu.memory_space<vmem>>, vector<1x24x32xf32>
    %42 = vector.shape_cast %41 : vector<1x24x32xf32> to vector<24x32xf32>
    %cst_42 = arith.constant dense<0.000000e+00> : vector<24x384xf32>
    %43 = tpu.matmul %42, %40, %cst_42 {dimension_numbers = #tpu.dot_dimension_numbers<[1], [0], [0], [1], [0, 0, 1, 1], [], []>} : vector<24x32xf32>, vector<32x384xf32>, vector<24x384xf32> -> vector<24x384xf32>
    %44 = arith.addf %39, %43 : vector<24x384xf32>
    %c0_43 = arith.constant 0 : index
    %c38 = arith.constant 38 : index
    %45 = vector.load %arg9[%c0_43, %c38] : memref<32x512xf32, #tpu.memory_space<vmem>>, vector<32x384xf32>
    %c8 = arith.constant 8 : index
    %c0_44 = arith.constant 0 : index
    %c0_45 = arith.constant 0 : index
    %46 = vector.load %arg4[%c8, %c0_44, %c0_45] : memref<9x24x32xf32, #tpu.memory_space<vmem>>, vector<1x24x32xf32>
    %47 = vector.shape_cast %46 : vector<1x24x32xf32> to vector<24x32xf32>
    %cst_46 = arith.constant dense<0.000000e+00> : vector<24x384xf32>
    %48 = tpu.matmul %47, %45, %cst_46 {dimension_numbers = #tpu.dot_dimension_numbers<[1], [0], [0], [1], [0, 0, 1, 1], [], []>} : vector<24x32xf32>, vector<32x384xf32>, vector<24x384xf32> -> vector<24x384xf32>
    %49 = arith.addf %44, %48 : vector<24x384xf32>
    %c0_47 = arith.constant 0 : index
    %c0_48 = arith.constant 0 : index
    %50 = vector.load %arg5[%c0_47, %c0_48] : memref<24x1xf32, #tpu.memory_space<vmem>>, vector<24x1xf32>
    %51 = vector.broadcast %50 : vector<24x1xf32> to vector<24x384xf32>
    %52 = arith.addf %49, %51 : vector<24x384xf32>
    %cst_49 = arith.constant 0.000000e+00 : f32
    %53 = vector.broadcast %cst_49 : f32 to vector<24x384xf32>
    %54 = arith.maximumf %52, %53 : vector<24x384xf32>
    %c0_50 = arith.constant 0 : index
    %c0_51 = arith.constant 0 : index
    %55 = vector.load %arg6[%c0_50, %c0_51] : memref<5x24xf32, #tpu.memory_space<vmem>>, vector<5x24xf32>
    %cst_52 = arith.constant dense<0.000000e+00> : vector<5x384xf32>
    %56 = tpu.matmul %55, %54, %cst_52 {dimension_numbers = #tpu.dot_dimension_numbers<[1], [0], [0], [1], [0, 0, 1, 1], [], []>} : vector<5x24xf32>, vector<24x384xf32>, vector<5x384xf32> -> vector<5x384xf32>
    %c0_53 = arith.constant 0 : index
    %c0_54 = arith.constant 0 : index
    %57 = vector.load %arg7[%c0_53, %c0_54] : memref<5x1xf32, #tpu.memory_space<vmem>>, vector<5x1xf32>
    %58 = vector.broadcast %57 : vector<5x1xf32> to vector<5x384xf32>
    %59 = arith.addf %56, %58 : vector<5x384xf32>
    %c0_55 = arith.constant 0 : index
    %c0_56 = arith.constant 0 : index
    %c0_57 = arith.constant 0 : index
    %60 = vector.load %arg8[%c0_55, %c0_56, %c0_57] : memref<1x5x384xf32, #tpu.memory_space<vmem>>, vector<1x5x384xf32>
    %61 = vector.shape_cast %60 : vector<1x5x384xf32> to vector<5x384xf32>
    %62 = vector.shape_cast %59 : vector<5x384xf32> to vector<1x5x384xf32>
    tpu.vector_store %arg8[%c0_55, %c0_56, %c0_57], %62 {strides = array<i32>} : memref<1x5x384xf32, #tpu.memory_space<vmem>>, vector<1x5x384xf32>,
    return
  }
  func.func @transform_0(%arg0: i32, %arg1: i32) -> (i32, i32, i32) {
    %c0_i32 = arith.constant 0 : i32
    %c0_i32_0 = arith.constant 0 : i32
    return %arg0, %c0_i32, %arg1 : i32, i32, i32
  }
  func.func @transform_1(%arg0: i32, %arg1: i32) -> (i32, i32, i32) {
    %c1_i32 = arith.constant 1 : i32
    %0 = arith.addi %arg1, %c1_i32 : i32
    %c3_i32 = arith.constant 3 : i32
    %1 = arith.muli %0, %c3_i32 : i32
    %c0_i32 = arith.constant 0 : i32
    %c0_i32_0 = arith.constant 0 : i32
    return %arg0, %c0_i32, %1 : i32, i32, i32
  }
  func.func @transform_2(%arg0: i32, %arg1: i32) -> (i32, i32, i32) {
    %c0_i32 = arith.constant 0 : i32
    %c0_i32_0 = arith.constant 0 : i32
    %c0_i32_1 = arith.constant 0 : i32
    %c0_i32_2 = arith.constant 0 : i32
    return %c0_i32, %c0_i32_0, %c0_i32_1 : i32, i32, i32
  }
  func.func @transform_3(%arg0: i32, %arg1: i32) -> (i32, i32) {
    %c0_i32 = arith.constant 0 : i32
    %c0_i32_0 = arith.constant 0 : i32
    %c0_i32_1 = arith.constant 0 : i32
    return %c0_i32, %c0_i32_0 : i32, i32
  }
  func.func @transform_4(%arg0: i32, %arg1: i32) -> (i32, i32) {
    %c0_i32 = arith.constant 0 : i32
    %c0_i32_0 = arith.constant 0 : i32
    %c0_i32_1 = arith.constant 0 : i32
    return %c0_i32, %c0_i32_0 : i32, i32
  }
  func.func @transform_5(%arg0: i32, %arg1: i32) -> (i32, i32) {
    %c0_i32 = arith.constant 0 : i32
    %c0_i32_0 = arith.constant 0 : i32
    %c0_i32_1 = arith.constant 0 : i32
    return %c0_i32, %c0_i32_0 : i32, i32
  }
  func.func @transform_6(%arg0: i32, %arg1: i32) -> (i32, i32, i32) {
    %c0_i32 = arith.constant 0 : i32
    %c0_i32_0 = arith.constant 0 : i32
    return %arg0, %c0_i32, %arg1 : i32, i32, i32
  }
}

</mosaic_0001>

<llo_original>
// kernel: tpu_custom_call.1
$region0: #{tpu_custom_call.1}
  #allocation0 [shape = 'u32[]', space=smem, size = 0x4, offset = 0x4, fixed_abs, tag = 'smem constant byte address 0x4 - core index']
  #allocation1 [shape = 'u32[144,128]{1,0:T(1,128)}', space=vmem, size = 0x12000, scoped, tag = 'internal scratch']
  #allocation2 [shape = 'f32[32,512]{1,0:T(8,128)}', space=vmem, size = 0x10000, scoped, tag = 'scratch operand']
  %s0 = inlined_call_operand.hbm [shape: f32[2,32,512], index: 0, kind: input, shape index: {}]
  %s1 = inlined_call_operand.hbm [shape: f32[2,32,512], index: 1, kind: input, shape index: {}]
  %s2 = inlined_call_operand.hbm [shape: f32[9,24,32], index: 2, kind: input, shape index: {}]
  %s3 = inlined_call_operand.vmem [shape: f32[24,1], index: 3, kind: input, shape index: {}]
  %s4 = inlined_call_operand.vmem [shape: f32[5,24], index: 4, kind: input, shape index: {}]
  %s5 = inlined_call_operand.vmem [shape: f32[5,1], index: 5, kind: input, shape index: {}]
  %s6 = inlined_call_operand.vmem [shape: f32[2,5,384], index: 6, kind: output, shape index: {}]
  %s7 = sld [smem:[#allocation0]]
  $region69: #{tpu_custom_call.1} parent=0
    _
  %s9 = ssub.s32 1, %s7
  %s10 = scalar_select 0, %s9, %s7
  $region1: #{tpu_custom_call.1} parent=0
    #allocation3 [shape = 'u8[98304]{0}', space=vmem, size = 0x18000, scoped, tag = 'input window, operand 0']
    #allocation4 [shape = 's32[2]{0}', space=sflag, size = 0x8, scoped, tag = 'scoped memory for tpu_custom_call.1']
    #allocation5 [shape = 'u8[32768]{0}', space=vmem, size = 0x8000, scoped, tag = 'input window, operand 1']
    #allocation6 [shape = 's32[2]{0}', space=sflag, size = 0x8, scoped, tag = 'scoped memory for tpu_custom_call.1']
    #allocation7 [shape = 'u8[110592]{0}', space=vmem, size = 0x1b000, scoped, tag = 'input window, operand 2, single buffered']
    %11 = vsyncpa [#allocation4], 0
    %s12 = scalar_lea.sflag [#allocation4], 1
    %13 = vsyncpa %s12, 0
    %14 = vsyncpa [#allocation6], 0
    %s15 = scalar_lea.sflag [#allocation6], 1
    %16 = vsyncpa %s15, 0
    loop: start=0, step=1, limit=4
    $region2: #{tpu_custom_call.1} parent=1 // loop_pre_header
      _
    $region3: #{tpu_custom_call.1} parent=1 // loop_header
      %s18 = sphi 0, %s22
      %p19 = scmp.ge.s32.totalorder %s18, 4
      %s25 = sphi 0, %s37
      %s26 = sphi 0, %s33
      %s27 = sphi 0, %s25
      %s28 = sphi 0, %s26
      %s29 = sphi 0, %s27
      %s30 = sphi 0, %s28
      %s42 = sphi 0, %s44
      %s45 = sphi 0, %s42
      %s46 = sphi 0, %s45
      %s62 = sphi 0, %s46
      %s74 = sphi 0, %s76
      %s77 = sphi 0, %s74
      %s78 = sphi 0, %s77
      %s94 = sphi 0, %s78
      %s98 = sphi 0, %s98
      %s100 = sphi 0, %s98
      %s101 = sphi 0, %s100
      %s115 = sphi 0, %s101
      %s119 = sphi 0, %s119
      %s121 = sphi 0, %s119
      %s122 = sphi 0, %s121
      %s136 = sphi 0, %s122
      %s140 = sphi 0, %s140
      %s142 = sphi 0, %s140
      %s143 = sphi 0, %s142
      %s157 = sphi 0, %s143
      %s161 = sphi 0, %s161
      %s163 = sphi 0, %s161
      %s164 = sphi 0, %s163
      %s178 = sphi 0, %s164
      %s186 = sphi 0, %s188
      %s189 = sphi 0, %s186
      %s190 = sphi 0, %s189
      %s206 = sphi 0, %s190
    $region4: #{tpu_custom_call.1} parent=1 // loop_header_branch
      %21 = sbr.rel (%p19) target = $region8
    $region5: #{tpu_custom_call.1} parent=1 // loop_body
      %s23 = ssub.s32 %s18, 1
      %s24 = ssub.s32 %s18, 2
      %s31 = sadd.s32 1, %s26
      %p32 = scmp.ge.s32.totalorder %s31, 1
      %s33 = scalar_select %p32, 0, %s31
      %s34 = sadd.s32 1, %s25
      %s35 = scalar_select %p32, %s34, %s25
      %p36 = scmp.ge.s32.totalorder %s35, 2
      %s37 = scalar_select %p36, 0, %s35
      %s38 = ssub.s32 %s25, %s37
      %s39 = ssub.s32 %s26, %s33
      %s40 = sor.u32 %s38, %s39
      %p41 = scmp.eq.s32.totalorder %s40, 0
      %s43 = sadd.s32 %s42, 1
      %s44 = scalar_select %p41, %s42, %s43
      %p47 = pneg %p41
      %p48 = scmp.eq.s32.totalorder %s18, 1
      %p49 = por %p47, %p48
      %p50 = scmp.ne.s32.totalorder %s42, %s45
      %p51 = scmp.eq.s32.totalorder %s18, 0
      %p52 = por %p50, %p51
      %p53 = scmp.ne.s32.totalorder %s42, %s45
      %p54 = scmp.eq.s32.totalorder %s23, 1
      %p55 = por %p53, %p54
      %p56 = scmp.ne.s32.totalorder %s45, %s46
      %p57 = scmp.eq.s32.totalorder %s23, 0
      %p58 = por %p56, %p57
      %p59 = scmp.ne.s32.totalorder %s45, %s46
      %p60 = scmp.eq.s32.totalorder %s24, 1
      %p61 = por %p59, %p60
      %p63 = scmp.ne.s32.totalorder %s46, %s62
      %p64 = scmp.eq.s32.totalorder %s24, 0
      %p65 = por %p63, %p64
      %s66 = sadd.s32 %s26, 1
      %s67 = smul.u32 %s66, 3
      %s68 = sadd.s32 %s33, 1
      %s69 = smul.u32 %s68, 3
      %s70 = ssub.s32 %s25, %s37
      %s71 = ssub.s32 %s67, %s69
      %s72 = sor.u32 %s70, %s71
      %p73 = scmp.eq.s32.totalorder %s72, 0
      %s75 = sadd.s32 %s74, 1
      %s76 = scalar_select %p73, %s74, %s75
      %p79 = pneg %p73
      %p80 = scmp.eq.s32.totalorder %s18, 1
      %p81 = por %p79, %p80
      %p82 = scmp.ne.s32.totalorder %s74, %s77
      %p83 = scmp.eq.s32.totalorder %s18, 0
      %p84 = por %p82, %p83
      %p85 = scmp.ne.s32.totalorder %s74, %s77
      %p86 = scmp.eq.s32.totalorder %s23, 1
      %p87 = por %p85, %p86
      %p88 = scmp.ne.s32.totalorder %s77, %s78
      %p89 = scmp.eq.s32.totalorder %s23, 0
      %p90 = por %p88, %p89
      %p91 = scmp.ne.s32.totalorder %s77, %s78
      %p92 = scmp.eq.s32.totalorder %s24, 1
      %p93 = por %p91, %p92
      %p95 = scmp.ne.s32.totalorder %s78, %s94
      %p96 = scmp.eq.s32.totalorder %s24, 0
      %p97 = por %p95, %p96
      %s99 = sadd.s32 %s98, 1
      %p102 = scmp.eq.s32.totalorder %s18, 1
      %p103 = scmp.ne.s32.totalorder %s98, %s100
      %p104 = scmp.eq.s32.totalorder %s18, 0
      %p105 = por %p103, %p104
      %p106 = scmp.ne.s32.totalorder %s98, %s100
      %p107 = scmp.eq.s32.totalorder %s23, 1
      %p108 = por %p106, %p107
      %p109 = scmp.ne.s32.totalorder %s100, %s101
      %p110 = scmp.eq.s32.totalorder %s23, 0
      %p111 = por %p109, %p110
      %p112 = scmp.ne.s32.totalorder %s100, %s101
      %p113 = scmp.eq.s32.totalorder %s24, 1
      %p114 = por %p112, %p113
      %p116 = scmp.ne.s32.totalorder %s101, %s115
      %p117 = scmp.eq.s32.totalorder %s24, 0
      %p118 = por %p116, %p117
      %s120 = sadd.s32 %s119, 1
      %p123 = scmp.eq.s32.totalorder %s18, 1
      %p124 = scmp.ne.s32.totalorder %s119, %s121
      %p125 = scmp.eq.s32.totalorder %s18, 0
      %p126 = por %p124, %p125
      %p127 = scmp.ne.s32.totalorder %s119, %s121
      %p128 = scmp.eq.s32.totalorder %s23, 1
      %p129 = por %p127, %p128
      %p130 = scmp.ne.s32.totalorder %s121, %s122
      %p131 = scmp.eq.s32.totalorder %s23, 0
      %p132 = por %p130, %p131
      %p133 = scmp.ne.s32.totalorder %s121, %s122
      %p134 = scmp.eq.s32.totalorder %s24, 1
      %p135 = por %p133, %p134
      %p137 = scmp.ne.s32.totalorder %s122, %s136
      %p138 = scmp.eq.s32.totalorder %s24, 0
      %p139 = por %p137, %p138
      %s141 = sadd.s32 %s140, 1
      %p144 = scmp.eq.s32.totalorder %s18, 1
      %p145 = scmp.ne.s32.totalorder %s140, %s142
      %p146 = scmp.eq.s32.totalorder %s18, 0
      %p147 = por %p145, %p146
      %p148 = scmp.ne.s32.totalorder %s140, %s142
      %p149 = scmp.eq.s32.totalorder %s23, 1
      %p150 = por %p148, %p149
      %p151 = scmp.ne.s32.totalorder %s142, %s143
      %p152 = scmp.eq.s32.totalorder %s23, 0
      %p153 = por %p151, %p152
      %p154 = scmp.ne.s32.totalorder %s142, %s143
      %p155 = scmp.eq.s32.totalorder %s24, 1
      %p156 = por %p154, %p155
      %p158 = scmp.ne.s32.totalorder %s143, %s157
      %p159 = scmp.eq.s32.totalorder %s24, 0
      %p160 = por %p158, %p159
      %s162 = sadd.s32 %s161, 1
      %p165 = scmp.eq.s32.totalorder %s18, 1
      %p166 = scmp.ne.s32.totalorder %s161, %s163
      %p167 = scmp.eq.s32.totalorder %s18, 0
      %p168 = por %p166, %p167
      %p169 = scmp.ne.s32.totalorder %s161, %s163
      %p170 = scmp.eq.s32.totalorder %s23, 1
      %p171 = por %p169, %p170
      %p172 = scmp.ne.s32.totalorder %s163, %s164
      %p173 = scmp.eq.s32.totalorder %s23, 0
      %p174 = por %p172, %p173
      %p175 = scmp.ne.s32.totalorder %s163, %s164
      %p176 = scmp.eq.s32.totalorder %s24, 1
      %p177 = por %p175, %p176
      %p179 = scmp.ne.s32.totalorder %s164, %s178
      %p180 = scmp.eq.s32.totalorder %s24, 0
      %p181 = por %p179, %p180
      %s182 = ssub.s32 %s25, %s37
      %s183 = ssub.s32 %s26, %s33
      %s184 = sor.u32 %s182, %s183
      %p185 = scmp.eq.s32.totalorder %s184, 0
      %s187 = sadd.s32 %s186, 1
      %s188 = scalar_select %p185, %s186, %s187
      %p191 = pneg %p185
      %p192 = scmp.eq.s32.totalorder %s18, 1
      %p193 = por %p191, %p192
      %p194 = scmp.ne.s32.totalorder %s186, %s189
      %p195 = scmp.eq.s32.totalorder %s18, 0
      %p196 = por %p194, %p195
      %p197 = scmp.ne.s32.totalorder %s186, %s189
      %p198 = scmp.eq.s32.totalorder %s23, 1
      %p199 = por %p197, %p198
      %p200 = scmp.ne.s32.totalorder %s189, %s190
      %p201 = scmp.eq.s32.totalorder %s23, 0
      %p202 = por %p200, %p201
      %p203 = scmp.ne.s32.totalorder %s189, %s190
      %p204 = scmp.eq.s32.totalorder %s24, 1
      %p205 = por %p203, %p204
      %p207 = scmp.ne.s32.totalorder %s190, %s206
      %p208 = scmp.eq.s32.totalorder %s24, 0
      %p209 = por %p207, %p208
      %p210 = scmp.le.s32.totalorder 1, %s18
      %p211 = scmp.lt.s32.totalorder %s18, 3
      %p212 = pnand %p210, %p211
      %p213 = pneg %p212
      // Predicated region
      $region9: #{tpu_custom_call.1} parent=5 // pred_check
        _
      $region10: #{tpu_custom_call.1} parent=5 // pred_check_branch
        %215 = sbr.rel (%p212) target = $region12
      $region11: #{tpu_custom_call.1} parent=5 // pred_region
        %s216 = ssub.s32 %s18, 1
        // Predicated region
        $region13: #{tpu_custom_call.1} parent=11 // pred_check
          %p217 = pneg %p111
        $region14: #{tpu_custom_call.1} parent=11 // pred_check_branch
          %219 = sbr.rel (%p217) target = $region16
        $region15: #{tpu_custom_call.1} parent=11 // pred_region
          %s221 = ssub.s32 3456, 3456
          %222 = vsyncadd [#allocation6], %s221
          %s223 = sshll.u32 [#allocation7], 4
          %s224 = int_to_ptr.vmem [resolvable:$true] %s223
          %229 = dma.hbm_to_vmem [thread:$0]  %s2, 3456, %s224, [#allocation6], 128, 128, 8
        $region16: #{tpu_custom_call.1} parent=11 // pred_fallthru
          _
        // Predicated region
        $region17: #{tpu_custom_call.1} parent=11 // pred_check
          %p230 = pneg %p132
        $region18: #{tpu_custom_call.1} parent=11 // pred_check_branch
          %232 = sbr.rel (%p230) target = $region20
        $region19: #{tpu_custom_call.1} parent=11 // pred_region
          _
        $region20: #{tpu_custom_call.1} parent=11 // pred_fallthru
          _
        // Predicated region
        $region21: #{tpu_custom_call.1} parent=11 // pred_check
          %p233 = pneg %p153
        $region22: #{tpu_custom_call.1} parent=11 // pred_check_branch
          %235 = sbr.rel (%p233) target = $region24
        $region23: #{tpu_custom_call.1} parent=11 // pred_region
          _
        $region24: #{tpu_custom_call.1} parent=11 // pred_fallthru
          _
        // Predicated region
        $region25: #{tpu_custom_call.1} parent=11 // pred_check
          %p236 = pneg %p174
        $region26: #{tpu_custom_call.1} parent=11 // pred_check_branch
          %238 = sbr.rel (%p236) target = $region28
        $region27: #{tpu_custom_call.1} parent=11 // pred_region
          _
        $region28: #{tpu_custom_call.1} parent=11 // pred_fallthru
          _
      $region12: #{tpu_custom_call.1} parent=5 // pred_fallthru
        _
      %p239 = scmp.lt.s32.totalorder %s18, 2
      // Predicated region
      $region29: #{tpu_custom_call.1} parent=5 // pred_check
        %p240 = pneg %p239
      $region30: #{tpu_custom_call.1} parent=5 // pred_check_branch
        %242 = sbr.rel (%p240) target = $region32
      $region31: #{tpu_custom_call.1} parent=5 // pred_region
        // Predicated region
        $region33: #{tpu_custom_call.1} parent=31 // pred_check
          %p243 = pneg %p52
        $region34: #{tpu_custom_call.1} parent=31 // pred_check_branch
          %245 = sbr.rel (%p243) target = $region36
        $region35: #{tpu_custom_call.1} parent=31 // pred_region
          %s246 = sand.u32 %s42, 1
          %s247 = scalar_lea.sflag [#allocation4], %s246
          %s248 = sand.u32 %s42, 1
          %s249 = smul.addr %s248, 96
          %s250 = scalar_lea.vmem [#allocation3], %s249
          %s251 = smul.u32 3, %s26
          %s252 = ssub.s32 4, %s251
          %p253 = scmp.lt.s32.totalorder %s252, 3
          %s254 = scalar_select %p253, %s252, 3
          %s255 = smul.u32 512, %s254
          %s257 = ssub.s32 1536, %s255
          %258 = vsyncadd %s247, %s257
          %p259 = scmp.ne.s32.totalorder 0, %s255
          %s260 = smul.addr %s25, 16
          %s261 = sadd.s32 %s251, %s260
          %s262 = smul.addr %s261, 128
          %s263 = scalar_lea.hbm %s0, %s262
          %s264 = smul.u32 %s254, 8
          %s265 = smul.u32 %s264, 4
          %s266 = sshll.u32 %s250, 4
          %s267 = int_to_ptr.vmem [resolvable:$true] %s266
          %s268 = sshll.u32 %s265, 4
          %272 = dma.hbm_to_vmem [thread:$0]  (%p259), %s263, %s268, %s267, %s247, 512, 384, %s264
        $region36: #{tpu_custom_call.1} parent=31 // pred_fallthru
          _
        // Predicated region
        $region37: #{tpu_custom_call.1} parent=31 // pred_check
          %p273 = pneg %p84
        $region38: #{tpu_custom_call.1} parent=31 // pred_check_branch
          %275 = sbr.rel (%p273) target = $region40
        $region39: #{tpu_custom_call.1} parent=31 // pred_region
          %s276 = sand.u32 %s18, 1
          %s277 = scalar_lea.sflag [#allocation6], %s276
          %s278 = sand.u32 %s74, 1
          %s279 = smul.addr %s278, 32
          %s280 = scalar_lea.vmem [#allocation5], %s279
          %s281 = sadd.s32 %s26, 1
          %s282 = smul.u32 %s281, 3
          %s284 = ssub.s32 512, 512
          %285 = vsyncadd %s277, %s284
          %s286 = smul.addr %s25, 16
          %s287 = sadd.s32 %s282, %s286
          %s288 = smul.addr %s287, 128
          %s289 = scalar_lea.hbm %s1, %s288
          %s290 = sshll.u32 %s280, 4
          %s291 = int_to_ptr.vmem [resolvable:$true] %s290
          %296 = dma.hbm_to_vmem [thread:$0]  %s289, 512, %s291, %s277, 512, 128, 8
        $region40: #{tpu_custom_call.1} parent=31 // pred_fallthru
          _
      $region32: #{tpu_custom_call.1} parent=5 // pred_fallthru
        _
      %p297 = scmp.le.s32.totalorder 1, %s18
      %p298 = scmp.lt.s32.totalorder %s18, 3
      %p299 = pnand %p297, %p298
      %p300 = pneg %p299
      // Predicated region
      $region41: #{tpu_custom_call.1} parent=5 // pred_check
        _
      $region42: #{tpu_custom_call.1} parent=5 // pred_check_branch
        %302 = sbr.rel (%p299) target = $region44
      $region43: #{tpu_custom_call.1} parent=5 // pred_region
        %s303 = ssub.s32 %s18, 1
        %s304 = sand.u32 %s45, 1
        %s305 = scalar_lea.sflag [#allocation4], %s304
        %s306 = sand.u32 %s45, 1
        %s307 = smul.addr %s306, 96
        %s308 = scalar_lea.vmem [#allocation3], %s307
        // Predicated region
        $region45: #{tpu_custom_call.1} parent=43 // pred_check
          %p309 = pneg %p58
        $region46: #{tpu_custom_call.1} parent=43 // pred_check_branch
          %311 = sbr.rel (%p309) target = $region48
        $region47: #{tpu_custom_call.1} parent=43 // pred_region
          %312 = dma.done %s305, 1536
        $region48: #{tpu_custom_call.1} parent=43 // pred_fallthru
          _
        %s313 = sand.u32 %s23, 1
        %s314 = scalar_lea.sflag [#allocation6], %s313
        %s315 = sand.u32 %s77, 1
        %s316 = smul.addr %s315, 32
        %s317 = scalar_lea.vmem [#allocation5], %s316
        // Predicated region
        $region49: #{tpu_custom_call.1} parent=43 // pred_check
          %p318 = pneg %p90
        $region50: #{tpu_custom_call.1} parent=43 // pred_check_branch
          %320 = sbr.rel (%p318) target = $region52
        $region51: #{tpu_custom_call.1} parent=43 // pred_region
          %321 = dma.done %s314, 512
        $region52: #{tpu_custom_call.1} parent=43 // pred_fallthru
          _
        // Predicated region
        $region53: #{tpu_custom_call.1} parent=43 // pred_check
          %p322 = pneg %p111
        $region54: #{tpu_custom_call.1} parent=43 // pred_check_branch
          %324 = sbr.rel (%p322) target = $region56
        $region55: #{tpu_custom_call.1} parent=43 // pred_region
          %325 = dma.done [#allocation6], 3456
        $region56: #{tpu_custom_call.1} parent=43 // pred_fallthru
          _
        %s326 = sand.u32 %s45, 1
        %s327 = scalar_lea.sflag [#allocation4], %s326
        %s328 = sand.u32 %s45, 1
        %s329 = smul.addr %s328, 96
        %s330 = scalar_lea.vmem [#allocation3], %s329
        %p331 = pneg %p58
        %p332 = pneg %p55
        %s333 = sand.u32 %s23, 1
        %s334 = scalar_lea.sflag [#allocation6], %s333
        %s335 = sand.u32 %s77, 1
        %s336 = smul.addr %s335, 32
        %s337 = scalar_lea.vmem [#allocation5], %s336
        %p338 = pneg %p90
        %p339 = pneg %p87
        %p340 = pneg %p111
        %p341 = pneg %p108
        %p342 = pneg %p132
        %p343 = pneg %p129
        %p344 = pneg %p153
        %p345 = pneg %p150
        %p346 = pneg %p174
        %p347 = pneg %p171
        %p348 = pneg %p202
        %p349 = pneg %p199
        %s350 = smul.u32 3, %s28
        %p351 = scmp.lt.s32.totalorder %s27, 1
        %s352 = scalar_select %p351, %s27, 1
        %p353 = scmp.lt.s32.totalorder %s350, 2
        %s354 = scalar_select %p353, %s350, 2
        %s355 = smul.addr %s352, 3
        %s356 = sadd.s32 %s354, %s355
        %s357 = smul.addr %s356, 8
        %s358 = scalar_lea.vmem %s6, %s357
        %s359 = smul.u32 3, %s28
        %s360 = ssub.s32 4, %s359
        %p361 = scmp.lt.s32.totalorder %s360, 3
        %s362 = scalar_select %p361, %s360, 3
        %s363 = smul.u32 512, %s362
        %s364 = sadd.s32 %s28, 1
        %s365 = smul.u32 %s364, 3
        %s366 = smul.u32 3, %s28
        %p367 = scmp.lt.s32.totalorder %s27, 1
        %s368 = scalar_select %p367, %s27, 1
        %p369 = scmp.lt.s32.totalorder %s366, 2
        %s370 = scalar_select %p369, %s366, 2
        %s371 = smul.addr %s368, 3
        %s372 = sadd.s32 %s370, %s371
        %s373 = smul.addr %s372, 8
        %s374 = scalar_lea.vmem %s6, %s373
        %s375 = smul.u32 3, %s28
        %v376 = vld [vmem:[%s308] sm:$0xff]
        %v377 = vld [vmem:[%s308 + $0x8] sm:$0xff]
        %v378 = vld [vmem:[%s308 + $0x10] sm:$0xff]
        %v379 = vld [vmem:[%s308 + $0x18] sm:$0xff]
        %v380 = vld [vmem:[%s308 + $0x20] sm:$0xff]
        %v381 = vld [vmem:[%s308 + $0x28] sm:$0xff]
        %v382 = vld [vmem:[%s308 + $0x30] sm:$0xff]
        %v383 = vld [vmem:[%s308 + $0x38] sm:$0xff]
        %v384 = vld [vmem:[%s308 + $0x40] sm:$0xff]
        %v385 = vld [vmem:[%s308 + $0x48] sm:$0xff]
        %v386 = vld [vmem:[%s308 + $0x50] sm:$0xff]
        %v387 = vld [vmem:[%s308 + $0x58] sm:$0xff]
        %388 = vst [vmem:[#allocation2] sm:$0xff] %v376
        %389 = vst [vmem:[#allocation2 + $0x8] sm:$0xff] %v377
        %390 = vst [vmem:[#allocation2 + $0x10] sm:$0xff] %v378
        %391 = vst [vmem:[#allocation2 + $0x20] sm:$0xff] %v379
        %392 = vst [vmem:[#allocation2 + $0x28] sm:$0xff] %v380
        %393 = vst [vmem:[#allocation2 + $0x30] sm:$0xff] %v381
        %394 = vst [vmem:[#allocation2 + $0x40] sm:$0xff] %v382
        %395 = vst [vmem:[#allocation2 + $0x48] sm:$0xff] %v383
        %396 = vst [vmem:[#allocation2 + $0x50] sm:$0xff] %v384
        %397 = vst [vmem:[#allocation2 + $0x60] sm:$0xff] %v385
        %398 = vst [vmem:[#allocation2 + $0x68] sm:$0xff] %v386
        %399 = vst [vmem:[#allocation2 + $0x70] sm:$0xff] %v387
        %v400 = vld [vmem:[%s317] sm:$0xff]
        %v401 = vld [vmem:[%s317 + $0x8] sm:$0xff]
        %v402 = vld [vmem:[%s317 + $0x10] sm:$0xff]
        %v403 = vld [vmem:[%s317 + $0x18] sm:$0xff]
        %404 = vst [vmem:[#allocation2 + $0x18] sm:$0xff] %v400
        %405 = vst [vmem:[#allocation2 + $0x38] sm:$0xff] %v401
        %406 = vst [vmem:[#allocation2 + $0x58] sm:$0xff] %v402
        %407 = vst [vmem:[#allocation2 + $0x78] sm:$0xff] %v403
        %v408 = vld [vmem:[#allocation2] sm:$0xff]
        %v409 = vld [vmem:[#allocation2 + $0x8] sm:$0xff]
        %v410 = vld [vmem:[#allocation2 + $0x10] sm:$0xff]
        %v411 = vld [vmem:[#allocation2 + $0x20] sm:$0xff]
        %v412 = vld [vmem:[#allocation2 + $0x28] sm:$0xff]
        %v413 = vld [vmem:[#allocation2 + $0x30] sm:$0xff]
        %v414 = vld [vmem:[#allocation2 + $0x40] sm:$0xff]
        %v415 = vld [vmem:[#allocation2 + $0x48] sm:$0xff]
        %v416 = vld [vmem:[#allocation2 + $0x50] sm:$0xff]
        %v417 = vld [vmem:[#allocation2 + $0x60] sm:$0xff]
        %v418 = vld [vmem:[#allocation2 + $0x68] sm:$0xff]
        %v419 = vld [vmem:[#allocation2 + $0x70] sm:$0xff]
        %v420 = vld [vmem:[#allocation7] sm:$0xff]
        %v421 = vld [vmem:[#allocation7 + $0x8] sm:$0xff]
        %v422 = vld [vmem:[#allocation7 + $0x10] sm:$0xff]
        %v423 = vld [vmem:[#allocation2] sm:$0xff]
        %v424 = vld [vmem:[#allocation2 + $0x8] sm:$0xff]
        %v425 = vld [vmem:[#allocation2 + $0x10] sm:$0xff]
        %v426 = vld [vmem:[#allocation2 + $0x18] sm:$0xff]
        %v427 = vld [vmem:[#allocation2 + $0x20] sm:$0xff]
        %v428 = vld [vmem:[#allocation2 + $0x28] sm:$0xff]
        %v429 = vld [vmem:[#allocation2 + $0x30] sm:$0xff]
        %v430 = vld [vmem:[#allocation2 + $0x38] sm:$0xff]
        %v431 = vld [vmem:[#allocation2 + $0x40] sm:$0xff]
        %v432 = vld [vmem:[#allocation2 + $0x48] sm:$0xff]
        %v433 = vld [vmem:[#allocation2 + $0x50] sm:$0xff]
        %v434 = vld [vmem:[#allocation2 + $0x58] sm:$0xff]
        %v435 = vld [vmem:[#allocation2 + $0x60] sm:$0xff]
        %v436 = vld [vmem:[#allocation2 + $0x68] sm:$0xff]
        %v437 = vld [vmem:[#allocation2 + $0x70] sm:$0xff]
        %v438 = vld [vmem:[#allocation2 + $0x78] sm:$0xff]
        %s439 = scalar_lea.vmem [#allocation7], 24
        %v440 = vld [vmem:[%s439] sm:$0xff]
        %v441 = vld [vmem:[%s439 + $0x8] sm:$0xff]
        %v442 = vld [vmem:[%s439 + $0x10] sm:$0xff]
        %459 = vrot.lane.b32.xlu0 %v423, 127
        %v460 = vpop.permute.xlu0 %459
        %461 = vrot.lane.b32.xlu0 %v424, 127
        %v462 = vpop.permute.xlu0 %461
        %463 = vrot.lane.b32.xlu0 %v425, 127
        %v464 = vpop.permute.xlu0 %463
        %465 = vrot.lane.b32.xlu0 %v426, 127
        %v466 = vpop.permute.xlu0 %465
        %467 = vrot.lane.b32.xlu0 %v427, 127
        %v468 = vpop.permute.xlu0 %467
        %469 = vrot.lane.b32.xlu0 %v428, 127
        %v470 = vpop.permute.xlu0 %469
        %471 = vrot.lane.b32.xlu0 %v429, 127
        %v472 = vpop.permute.xlu0 %471
        %473 = vrot.lane.b32.xlu0 %v430, 127
        %v474 = vpop.permute.xlu0 %473
        %475 = vrot.lane.b32.xlu0 %v431, 127
        %v476 = vpop.permute.xlu0 %475
        %477 = vrot.lane.b32.xlu0 %v432, 127
        %v478 = vpop.permute.xlu0 %477
        %479 = vrot.lane.b32.xlu0 %v433, 127
        %v480 = vpop.permute.xlu0 %479
        %481 = vrot.lane.b32.xlu0 %v434, 127
        %v482 = vpop.permute.xlu0 %481
        %483 = vrot.lane.b32.xlu0 %v435, 127
        %v484 = vpop.permute.xlu0 %483
        %485 = vrot.lane.b32.xlu0 %v436, 127
        %v486 = vpop.permute.xlu0 %485
        %487 = vrot.lane.b32.xlu0 %v437, 127
        %v488 = vpop.permute.xlu0 %487
        %489 = vrot.lane.b32.xlu0 %v438, 127
        %v490 = vpop.permute.xlu0 %489
        %vm491 = vcmask 1039360
        %v492 = vsel %vm491, %v460, %v462
        %v493 = vsel %vm491, %v462, %v464
        %v494 = vsel %vm491, %v464, %v466
        %v495 = vsel %vm491, %v468, %v470
        %v496 = vsel %vm491, %v470, %v472
        %v497 = vsel %vm491, %v472, %v474
        %v498 = vsel %vm491, %v476, %v478
        %v499 = vsel %vm491, %v478, %v480
        %v500 = vsel %vm491, %v480, %v482
        %v501 = vsel %vm491, %v484, %v486
        %v502 = vsel %vm491, %v486, %v488
        %v503 = vsel %vm491, %v488, %v490
        %vm516 = vcmask 261120
        %v518 = vsel %vm516, %v440, 0
        %v521 = vsel %vm516, %v441, 0
        %v524 = vsel %vm516, %v442, 0
        %526 = vmatprep.subr.mxu0 %v493
        %527 = vmatpush1.msra.mxu0 %v492
        %528 = vmatprep.subr.mxu0 %v496
        %529 = vmatpush1.msra.mxu0 %v495
        %530 = vmatprep.subr.mxu0 %v499
        %531 = vmatpush1.msra.mxu0 %v498
        %532 = vmatprep.subr.mxu0 %v502
        %533 = vmatpush1.msra.mxu0 %v501
        %534 = vmatprep.subr.mxu0 0.0
        %535 = vmatpush1.msra.mxu0 0.0
        %536 = vmatprep.subr.mxu0 0.0
        %537 = vmatpush1.msra.mxu0 0.0
        %538 = vmatprep.subr.mxu0 0.0
        %539 = vmatpush1.msra.mxu0 0.0
        %540 = vmatprep.subr.mxu0 0.0
        %541 = vmatpush1.msra.mxu0 0.0
        %542 = vmatprep.subr.mxu0 0.0
        %543 = vmatpush1.msra.mxu0 0.0
        %544 = vmatprep.subr.mxu0 0.0
        %545 = vmatpush1.msra.mxu0 0.0
        %546 = vmatprep.subr.mxu0 0.0
        %547 = vmatpush1.msra.mxu0 0.0
        %548 = vmatprep.subr.mxu0 0.0
        %549 = vmatpush1.msra.mxu0 0.0
        %550 = vmatprep.subr.mxu0 0.0
        %551 = vmatpush1.msra.mxu0 0.0
        %552 = vmatprep.subr.mxu0 0.0
        %553 = vmatpush1.msra.mxu0 0.0
        %554 = vmatprep.subr.mxu0 0.0
        %555 = vmatpush1.msra.mxu0 0.0
        %556 = vmatprep.subr.mxu0 0.0
        %557 = vmatpush1.msra.mxu0 0.0
        %558 = vmatprep.subr.mxu0 0.0
        %559 = vmatpush1.msra.mxu0 0.0
        %560 = vmatprep.subr.mxu0 0.0
        %561 = vmatpush1.msra.mxu0 0.0
        %562 = vmatprep.subr.mxu0 0.0
        %563 = vmatpush1.msra.mxu0 0.0
        %564 = vmatprep.subr.mxu0 0.0
        %565 = vmatpush1.msra.mxu0 0.0
        %566 = vmatprep.subr.mxu0 0.0
        %567 = vmatpush1.msra.mxu0 0.0
        %568 = vmatprep.subr.mxu0 0.0
        %569 = vmatpush1.msra.mxu0 0.0
        %570 = vmatprep.subr.mxu0 0.0
        %571 = vmatpush1.msra.mxu0 0.0
        %572 = vmatprep.subr.mxu0 0.0
        %573 = vmatpush1.msra.mxu0 0.0
        %574 = vmatprep.subr.mxu0 0.0
        %575 = vmatpush1.msra.mxu0 0.0
        %576 = vmatprep.subr.mxu0 0.0
        %577 = vmatpush1.msra.mxu0 0.0
        %578 = vmatprep.subr.mxu0 0.0
        %579 = vmatpush1.msra.mxu0 0.0
        %580 = vmatprep.subr.mxu0 0.0
        %581 = vmatpush1.msra.mxu0 0.0
        %582 = vmatprep.subr.mxu0 0.0
        %583 = vmatpush1.msra.mxu0 0.0
        %584 = vmatprep.subr.mxu0 0.0
        %585 = vmatpush1.msra.mxu0 0.0
        %586 = vmatprep.subr.mxu0 0.0
        %587 = vmatpush1.msra.mxu0 0.0
        %588 = vmatprep.subr.mxu0 0.0
        %589 = vmatpush1.msra.mxu0 0.0
        %590 = vmatprep.mubr.f32.mxu0 0.0
        %591 = vmatmul.mubr.f32.gmra.mrb[0].mxu0 %v518
        %v592 = vpop.f32.mrb[0].mxu0
        %v593 = vadd.f32 0.0, %v592
        %v594 = vpop.f32.mrb[0].mxu0
        %v595 = vadd.f32 0.0, %v594
        %596 = vmatprep.mubr.f32.mxu0 0.0
        %597 = vmatmul.mubr.f32.gmra.mrb[0].mxu0 %v521
        %v598 = vpop.f32.mrb[0].mxu0
        %v599 = vadd.f32 0.0, %v598
        %v600 = vpop.f32.mrb[0].mxu0
        %v601 = vadd.f32 0.0, %v600
        %602 = vmatprep.mubr.f32.mxu0 0.0
        %603 = vmatmul.mubr.f32.gmra.mrb[0].mxu0 %v524
        %v604 = vpop.f32.mrb[0].mxu0
        %v605 = vadd.f32 0.0, %v604
        %v606 = vpop.f32.mrb[0].mxu0
        %v607 = vadd.f32 0.0, %v606
        %608 = vdwg.mxu0
        %609 = vmatprep.subr.mxu0 0.0
        %610 = vmatpush1.msra.mxu0 %v494
        %611 = vmatprep.subr.mxu0 0.0
        %612 = vmatpush1.msra.mxu0 %v497
        %613 = vmatprep.subr.mxu0 0.0
        %614 = vmatpush1.msra.mxu0 %v500
        %615 = vmatprep.subr.mxu0 0.0
        %616 = vmatpush1.msra.mxu0 %v503
        %617 = vmatprep.subr.mxu0 0.0
        %618 = vmatpush1.msra.mxu0 0.0
        %619 = vmatprep.subr.mxu0 0.0
        %620 = vmatpush1.msra.mxu0 0.0
        %621 = vmatprep.subr.mxu0 0.0
        %622 = vmatpush1.msra.mxu0 0.0
        %623 = vmatprep.subr.mxu0 0.0
        %624 = vmatpush1.msra.mxu0 0.0
        %625 = vmatprep.subr.mxu0 0.0
        %626 = vmatpush1.msra.mxu0 0.0
        %627 = vmatprep.subr.mxu0 0.0
        %628 = vmatpush1.msra.mxu0 0.0
        %629 = vmatprep.subr.mxu0 0.0
        %630 = vmatpush1.msra.mxu0 0.0
        %631 = vmatprep.subr.mxu0 0.0
        %632 = vmatpush1.msra.mxu0 0.0
        %633 = vmatprep.subr.mxu0 0.0
        %634 = vmatpush1.msra.mxu0 0.0
        %635 = vmatprep.subr.mxu0 0.0
        %636 = vmatpush1.msra.mxu0 0.0
        %637 = vmatprep.subr.mxu0 0.0
        %638 = vmatpush1.msra.mxu0 0.0
        %639 = vmatprep.subr.mxu0 0.0
        %640 = vmatpush1.msra.mxu0 0.0
        %641 = vmatprep.subr.mxu0 0.0
        %642 = vmatpush1.msra.mxu0 0.0
        %643 = vmatprep.subr.mxu0 0.0
        %644 = vmatpush1.msra.mxu0 0.0
        %645 = vmatprep.subr.mxu0 0.0
        %646 = vmatpush1.msra.mxu0 0.0
        %647 = vmatprep.subr.mxu0 0.0
        %648 = vmatpush1.msra.mxu0 0.0
        %649 = vmatprep.subr.mxu0 0.0
        %650 = vmatpush1.msra.mxu0 0.0
        %651 = vmatprep.subr.mxu0 0.0
        %652 = vmatpush1.msra.mxu0 0.0
        %653 = vmatprep.subr.mxu0 0.0
        %654 = vmatpush1.msra.mxu0 0.0
        %655 = vmatprep.subr.mxu0 0.0
        %656 = vmatpush1.msra.mxu0 0.0
        %657 = vmatprep.subr.mxu0 0.0
        %658 = vmatpush1.msra.mxu0 0.0
        %659 = vmatprep.subr.mxu0 0.0
        %660 = vmatpush1.msra.mxu0 0.0
        %661 = vmatprep.subr.mxu0 0.0
        %662 = vmatpush1.msra.mxu0 0.0
        %663 = vmatprep.subr.mxu0 0.0
        %664 = vmatpush1.msra.mxu0 0.0
        %665 = vmatprep.subr.mxu0 0.0
        %666 = vmatpush1.msra.mxu0 0.0
        %667 = vmatprep.subr.mxu0 0.0
        %668 = vmatpush1.msra.mxu0 0.0
        %669 = vmatprep.subr.mxu0 0.0
        %670 = vmatpush1.msra.mxu0 0.0
        %671 = vmatprep.subr.mxu0 0.0
        %672 = vmatpush1.msra.mxu0 0.0
        %673 = vmatprep.mubr.f32.mxu0 0.0
        %674 = vmatmul.mubr.f32.gmra.mrb[0].mxu0 %v518
        %v675 = vpop.f32.mrb[0].mxu0
        %v676 = vadd.f32 0.0, %v675
        %v677 = vpop.f32.mrb[0].mxu0
        %678 = vmatprep.mubr.f32.mxu0 0.0
        %679 = vmatmul.mubr.f32.gmra.mrb[0].mxu0 %v521
        %v680 = vpop.f32.mrb[0].mxu0
        %v681 = vadd.f32 0.0, %v680
        %v682 = vpop.f32.mrb[0].mxu0
        %683 = vmatprep.mubr.f32.mxu0 0.0
        %684 = vmatmul.mubr.f32.gmra.mrb[0].mxu0 %v524
        %v685 = vpop.f32.mrb[0].mxu0
        %v686 = vadd.f32 0.0, %v685
        %v687 = vpop.f32.mrb[0].mxu0
        %688 = vdwg.mxu0
        %v690 = vsel %vm516, %v420, 0
        %v693 = vsel %vm516, %v421, 0
        %v696 = vsel %vm516, %v422, 0
        %698 = vmatprep.subr.mxu0 %v409
        %699 = vmatpush1.msra.mxu0 %v408
        %700 = vmatprep.subr.mxu0 %v412
        %701 = vmatpush1.msra.mxu0 %v411
        %702 = vmatprep.subr.mxu0 %v415
        %703 = vmatpush1.msra.mxu0 %v414
        %704 = vmatprep.subr.mxu0 %v418
        %705 = vmatpush1.msra.mxu0 %v417
        %706 = vmatprep.subr.mxu0 0.0
        %707 = vmatpush1.msra.mxu0 0.0
        %708 = vmatprep.subr.mxu0 0.0
        %709 = vmatpush1.msra.mxu0 0.0
        %710 = vmatprep.subr.mxu0 0.0
        %711 = vmatpush1.msra.mxu0 0.0
        %712 = vmatprep.subr.mxu0 0.0
        %713 = vmatpush1.msra.mxu0 0.0
        %714 = vmatprep.subr.mxu0 0.0
        %715 = vmatpush1.msra.mxu0 0.0
        %716 = vmatprep.subr.mxu0 0.0
        %717 = vmatpush1.msra.mxu0 0.0
        %718 = vmatprep.subr.mxu0 0.0
        %719 = vmatpush1.msra.mxu0 0.0
        %720 = vmatprep.subr.mxu0 0.0
        %721 = vmatpush1.msra.mxu0 0.0
        %722 = vmatprep.subr.mxu0 0.0
        %723 = vmatpush1.msra.mxu0 0.0
        %724 = vmatprep.subr.mxu0 0.0
        %725 = vmatpush1.msra.mxu0 0.0
        %726 = vmatprep.subr.mxu0 0.0
        %727 = vmatpush1.msra.mxu0 0.0
        %728 = vmatprep.subr.mxu0 0.0
        %729 = vmatpush1.msra.mxu0 0.0
        %730 = vmatprep.subr.mxu0 0.0
        %731 = vmatpush1.msra.mxu0 0.0
        %732 = vmatprep.subr.mxu0 0.0
        %733 = vmatpush1.msra.mxu0 0.0
        %734 = vmatprep.subr.mxu0 0.0
        %735 = vmatpush1.msra.mxu0 0.0
        %736 = vmatprep.subr.mxu0 0.0
        %737 = vmatpush1.msra.mxu0 0.0
        %738 = vmatprep.subr.mxu0 0.0
        %739 = vmatpush1.msra.mxu0 0.0
        %740 = vmatprep.subr.mxu0 0.0
        %741 = vmatpush1.msra.mxu0 0.0
        %742 = vmatprep.subr.mxu0 0.0
        %743 = vmatpush1.msra.mxu0 0.0
        %744 = vmatprep.subr.mxu0 0.0
        %745 = vmatpush1.msra.mxu0 0.0
        %746 = vmatprep.subr.mxu0 0.0
        %747 = vmatpush1.msra.mxu0 0.0
        %748 = vmatprep.subr.mxu0 0.0
        %749 = vmatpush1.msra.mxu0 0.0
        %750 = vmatprep.subr.mxu0 0.0
        %751 = vmatpush1.msra.mxu0 0.0
        %752 = vmatprep.subr.mxu0 0.0
        %753 = vmatpush1.msra.mxu0 0.0
        %754 = vmatprep.subr.mxu0 0.0
        %755 = vmatpush1.msra.mxu0 0.0
        %756 = vmatprep.subr.mxu0 0.0
        %757 = vmatpush1.msra.mxu0 0.0
        %758 = vmatprep.subr.mxu0 0.0
        %759 = vmatpush1.msra.mxu0 0.0
        %760 = vmatprep.subr.mxu0 0.0
        %761 = vmatpush1.msra.mxu0 0.0
        %762 = vmatprep.mubr.f32.mxu0 0.0
        %763 = vmatmul.mubr.f32.gmra.mrb[0].mxu0 %v690
        %v764 = vpop.f32.mrb[0].mxu0
        %v765 = vadd.f32 %v593, %v764
        %v766 = vpop.f32.mrb[0].mxu0
        %v767 = vadd.f32 %v595, %v766
        %768 = vmatprep.mubr.f32.mxu0 0.0
        %769 = vmatmul.mubr.f32.gmra.mrb[0].mxu0 %v693
        %v770 = vpop.f32.mrb[0].mxu0
        %v771 = vadd.f32 %v599, %v770
        %v772 = vpop.f32.mrb[0].mxu0
        %v773 = vadd.f32 %v601, %v772
        %774 = vmatprep.mubr.f32.mxu0 0.0
        %775 = vmatmul.mubr.f32.gmra.mrb[0].mxu0 %v696
        %v776 = vpop.f32.mrb[0].mxu0
        %v777 = vadd.f32 %v605, %v776
        %v778 = vpop.f32.mrb[0].mxu0
        %v779 = vadd.f32 %v607, %v778
        %780 = vdwg.mxu0
        %781 = vmatprep.subr.mxu0 0.0
        %782 = vmatpush1.msra.mxu0 %v410
        %783 = vmatprep.subr.mxu0 0.0
        %784 = vmatpush1.msra.mxu0 %v413
        %785 = vmatprep.subr.mxu0 0.0
        %786 = vmatpush1.msra.mxu0 %v416
        %787 = vmatprep.subr.mxu0 0.0
        %788 = vmatpush1.msra.mxu0 %v419
        %789 = vmatprep.subr.mxu0 0.0
        %790 = vmatpush1.msra.mxu0 0.0
        %791 = vmatprep.subr.mxu0 0.0
        %792 = vmatpush1.msra.mxu0 0.0
        %793 = vmatprep.subr.mxu0 0.0
        %794 = vmatpush1.msra.mxu0 0.0
        %795 = vmatprep.subr.mxu0 0.0
        %796 = vmatpush1.msra.mxu0 0.0
        %797 = vmatprep.subr.mxu0 0.0
        %798 = vmatpush1.msra.mxu0 0.0
        %799 = vmatprep.subr.mxu0 0.0
        %800 = vmatpush1.msra.mxu0 0.0
        %801 = vmatprep.subr.mxu0 0.0
        %802 = vmatpush1.msra.mxu0 0.0
        %803 = vmatprep.subr.mxu0 0.0
        %804 = vmatpush1.msra.mxu0 0.0
        %805 = vmatprep.subr.mxu0 0.0
        %806 = vmatpush1.msra.mxu0 0.0
        %807 = vmatprep.subr.mxu0 0.0
        %808 = vmatpush1.msra.mxu0 0.0
        %809 = vmatprep.subr.mxu0 0.0
        %810 = vmatpush1.msra.mxu0 0.0
        %811 = vmatprep.subr.mxu0 0.0
        %812 = vmatpush1.msra.mxu0 0.0
        %813 = vmatprep.subr.mxu0 0.0
        %814 = vmatpush1.msra.mxu0 0.0
        %815 = vmatprep.subr.mxu0 0.0
        %816 = vmatpush1.msra.mxu0 0.0
        %817 = vmatprep.subr.mxu0 0.0
        %818 = vmatpush1.msra.mxu0 0.0
        %819 = vmatprep.subr.mxu0 0.0
        %820 = vmatpush1.msra.mxu0 0.0
        %821 = vmatprep.subr.mxu0 0.0
        %822 = vmatpush1.msra.mxu0 0.0
        %823 = vmatprep.subr.mxu0 0.0
        %824 = vmatpush1.msra.mxu0 0.0
        %825 = vmatprep.subr.mxu0 0.0
        %826 = vmatpush1.msra.mxu0 0.0
        %827 = vmatprep.subr.mxu0 0.0
        %828 = vmatpush1.msra.mxu0 0.0
        %829 = vmatprep.subr.mxu0 0.0
        %830 = vmatpush1.msra.mxu0 0.0
        %831 = vmatprep.subr.mxu0 0.0
        %832 = vmatpush1.msra.mxu0 0.0
        %833 = vmatprep.subr.mxu0 0.0
        %834 = vmatpush1.msra.mxu0 0.0
        %835 = vmatprep.subr.mxu0 0.0
        %836 = vmatpush1.msra.mxu0 0.0
        %837 = vmatprep.subr.mxu0 0.0
        %838 = vmatpush1.msra.mxu0 0.0
        %839 = vmatprep.subr.mxu0 0.0
        %840 = vmatpush1.msra.mxu0 0.0
        %841 = vmatprep.subr.mxu0 0.0
        %842 = vmatpush1.msra.mxu0 0.0
        %843 = vmatprep.subr.mxu0 0.0
        %844 = vmatpush1.msra.mxu0 0.0
        %845 = vmatprep.mubr.f32.mxu0 0.0
        %846 = vmatmul.mubr.f32.gmra.mrb[0].mxu0 %v690
        %v847 = vpop.f32.mrb[0].mxu0
        %v848 = vadd.f32 %v676, %v847
        %v849 = vpop.f32.mrb[0].mxu0
        %850 = vmatprep.mubr.f32.mxu0 0.0
        %851 = vmatmul.mubr.f32.gmra.mrb[0].mxu0 %v693
        %v852 = vpop.f32.mrb[0].mxu0
        %v853 = vadd.f32 %v681, %v852
        %v854 = vpop.f32.mrb[0].mxu0
        %855 = vmatprep.mubr.f32.mxu0 0.0
        %856 = vmatmul.mubr.f32.gmra.mrb[0].mxu0 %v696
        %v857 = vpop.f32.mrb[0].mxu0
        %v858 = vadd.f32 %v686, %v857
        %v859 = vpop.f32.mrb[0].mxu0
        %860 = vdwg.mxu0
        %s861 = scalar_lea.vmem [#allocation7], 48
        %v862 = vld [vmem:[%s861] sm:$0xff]
        %v863 = vld [vmem:[%s861 + $0x8] sm:$0xff]
        %v864 = vld [vmem:[%s861 + $0x10] sm:$0xff]
        %865 = vrot.lane.b32.xlu0 %v423, 126
        %v866 = vpop.permute.xlu0 %865
        %867 = vrot.lane.b32.xlu0 %v424, 126
        %v868 = vpop.permute.xlu0 %867
        %869 = vrot.lane.b32.xlu0 %v425, 126
        %v870 = vpop.permute.xlu0 %869
        %871 = vrot.lane.b32.xlu0 %v426, 126
        %v872 = vpop.permute.xlu0 %871
        %873 = vrot.lane.b32.xlu0 %v427, 126
        %v874 = vpop.permute.xlu0 %873
        %875 = vrot.lane.b32.xlu0 %v428, 126
        %v876 = vpop.permute.xlu0 %875
        %877 = vrot.lane.b32.xlu0 %v429, 126
        %v878 = vpop.permute.xlu0 %877
        %879 = vrot.lane.b32.xlu0 %v430, 126
        %v880 = vpop.permute.xlu0 %879
        %881 = vrot.lane.b32.xlu0 %v431, 126
        %v882 = vpop.permute.xlu0 %881
        %883 = vrot.lane.b32.xlu0 %v432, 126
        %v884 = vpop.permute.xlu0 %883
        %885 = vrot.lane.b32.xlu0 %v433, 126
        %v886 = vpop.permute.xlu0 %885
        %887 = vrot.lane.b32.xlu0 %v434, 126
        %v888 = vpop.permute.xlu0 %887
        %889 = vrot.lane.b32.xlu0 %v435, 126
        %v890 = vpop.permute.xlu0 %889
        %891 = vrot.lane.b32.xlu0 %v436, 126
        %v892 = vpop.permute.xlu0 %891
        %893 = vrot.lane.b32.xlu0 %v437, 126
        %v894 = vpop.permute.xlu0 %893
        %895 = vrot.lane.b32.xlu0 %v438, 126
        %v896 = vpop.permute.xlu0 %895
        %vm897 = vcmask 1031168
        %v898 = vsel %vm897, %v866, %v868
        %v899 = vsel %vm897, %v868, %v870
        %v900 = vsel %vm897, %v870, %v872
        %v901 = vsel %vm897, %v874, %v876
        %v902 = vsel %vm897, %v876, %v878
        %v903 = vsel %vm897, %v878, %v880
        %v904 = vsel %vm897, %v882, %v884
        %v905 = vsel %vm897, %v884, %v886
        %v906 = vsel %vm897, %v886, %v888
        %v907 = vsel %vm897, %v890, %v892
        %v908 = vsel %vm897, %v892, %v894
        %v909 = vsel %vm897, %v894, %v896
        %v923 = vsel %vm516, %v862, 0
        %v926 = vsel %vm516, %v863, 0
        %v929 = vsel %vm516, %v864, 0
        %931 = vmatprep.subr.mxu0 %v899
        %932 = vmatpush1.msra.mxu0 %v898
        %933 = vmatprep.subr.mxu0 %v902
        %934 = vmatpush1.msra.mxu0 %v901
        %935 = vmatprep.subr.mxu0 %v905
        %936 = vmatpush1.msra.mxu0 %v904
        %937 = vmatprep.subr.mxu0 %v908
        %938 = vmatpush1.msra.mxu0 %v907
        %939 = vmatprep.subr.mxu0 0.0
        %940 = vmatpush1.msra.mxu0 0.0
        %941 = vmatprep.subr.mxu0 0.0
        %942 = vmatpush1.msra.mxu0 0.0
        %943 = vmatprep.subr.mxu0 0.0
        %944 = vmatpush1.msra.mxu0 0.0
        %945 = vmatprep.subr.mxu0 0.0
        %946 = vmatpush1.msra.mxu0 0.0
        %947 = vmatprep.subr.mxu0 0.0
        %948 = vmatpush1.msra.mxu0 0.0
        %949 = vmatprep.subr.mxu0 0.0
        %950 = vmatpush1.msra.mxu0 0.0
        %951 = vmatprep.subr.mxu0 0.0
        %952 = vmatpush1.msra.mxu0 0.0
        %953 = vmatprep.subr.mxu0 0.0
        %954 = vmatpush1.msra.mxu0 0.0
        %955 = vmatprep.subr.mxu0 0.0
        %956 = vmatpush1.msra.mxu0 0.0
        %957 = vmatprep.subr.mxu0 0.0
        %958 = vmatpush1.msra.mxu0 0.0
        %959 = vmatprep.subr.mxu0 0.0
        %960 = vmatpush1.msra.mxu0 0.0
        %961 = vmatprep.subr.mxu0 0.0
        %962 = vmatpush1.msra.mxu0 0.0
        %963 = vmatprep.subr.mxu0 0.0
        %964 = vmatpush1.msra.mxu0 0.0
        %965 = vmatprep.subr.mxu0 0.0
        %966 = vmatpush1.msra.mxu0 0.0
        %967 = vmatprep.subr.mxu0 0.0
        %968 = vmatpush1.msra.mxu0 0.0
        %969 = vmatprep.subr.mxu0 0.0
        %970 = vmatpush1.msra.mxu0 0.0
        %971 = vmatprep.subr.mxu0 0.0
        %972 = vmatpush1.msra.mxu0 0.0
        %973 = vmatprep.subr.mxu0 0.0
        %974 = vmatpush1.msra.mxu0 0.0
        %975 = vmatprep.subr.mxu0 0.0
        %976 = vmatpush1.msra.mxu0 0.0
        %977 = vmatprep.subr.mxu0 0.0
        %978 = vmatpush1.msra.mxu0 0.0
        %979 = vmatprep.subr.mxu0 0.0
        %980 = vmatpush1.msra.mxu0 0.0
        %981 = vmatprep.subr.mxu0 0.0
        %982 = vmatpush1.msra.mxu0 0.0
        %983 = vmatprep.subr.mxu0 0.0
        %984 = vmatpush1.msra.mxu0 0.0
        %985 = vmatprep.subr.mxu0 0.0
        %986 = vmatpush1.msra.mxu0 0.0
        %987 = vmatprep.subr.mxu0 0.0
        %988 = vmatpush1.msra.mxu0 0.0
        %989 = vmatprep.subr.mxu0 0.0
        %990 = vmatpush1.msra.mxu0 0.0
        %991 = vmatprep.subr.mxu0 0.0
        %992 = vmatpush1.msra.mxu0 0.0
        %993 = vmatprep.subr.mxu0 0.0
        %994 = vmatpush1.msra.mxu0 0.0
        %995 = vmatprep.mubr.f32.mxu0 0.0
        %996 = vmatmul.mubr.f32.gmra.mrb[0].mxu0 %v923
        %v997 = vpop.f32.mrb[0].mxu0
        %v998 = vadd.f32 0.0, %v997
        %v999 = vpop.f32.mrb[0].mxu0
        %v1000 = vadd.f32 0.0, %v999
        %1001 = vmatprep.mubr.f32.mxu0 0.0
        %1002 = vmatmul.mubr.f32.gmra.mrb[0].mxu0 %v926
        %v1003 = vpop.f32.mrb[0].mxu0
        %v1004 = vadd.f32 0.0, %v1003
        %v1005 = vpop.f32.mrb[0].mxu0
        %v1006 = vadd.f32 0.0, %v1005
        %1007 = vmatprep.mubr.f32.mxu0 0.0
        %1008 = vmatmul.mubr.f32.gmra.mrb[0].mxu0 %v929
        %v1009 = vpop.f32.mrb[0].mxu0
        %v1010 = vadd.f32 0.0, %v1009
        %v1011 = vpop.f32.mrb[0].mxu0
        %v1012 = vadd.f32 0.0, %v1011
        %1013 = vdwg.mxu0
        %1014 = vmatprep.subr.mxu0 0.0
        %1015 = vmatpush1.msra.mxu0 %v900
        %1016 = vmatprep.subr.mxu0 0.0
        %1017 = vmatpush1.msra.mxu0 %v903
        %1018 = vmatprep.subr.mxu0 0.0
        %1019 = vmatpush1.msra.mxu0 %v906
        %1020 = vmatprep.subr.mxu0 0.0
        %1021 = vmatpush1.msra.mxu0 %v909
        %1022 = vmatprep.subr.mxu0 0.0
        %1023 = vmatpush1.msra.mxu0 0.0
        %1024 = vmatprep.subr.mxu0 0.0
        %1025 = vmatpush1.msra.mxu0 0.0
        %1026 = vmatprep.subr.mxu0 0.0
        %1027 = vmatpush1.msra.mxu0 0.0
        %1028 = vmatprep.subr.mxu0 0.0
        %1029 = vmatpush1.msra.mxu0 0.0
        %1030 = vmatprep.subr.mxu0 0.0
        %1031 = vmatpush1.msra.mxu0 0.0
        %1032 = vmatprep.subr.mxu0 0.0
        %1033 = vmatpush1.msra.mxu0 0.0
        %1034 = vmatprep.subr.mxu0 0.0
        %1035 = vmatpush1.msra.mxu0 0.0
        %1036 = vmatprep.subr.mxu0 0.0
        %1037 = vmatpush1.msra.mxu0 0.0
        %1038 = vmatprep.subr.mxu0 0.0
        %1039 = vmatpush1.msra.mxu0 0.0
        %1040 = vmatprep.subr.mxu0 0.0
        %1041 = vmatpush1.msra.mxu0 0.0
        %1042 = vmatprep.subr.mxu0 0.0
        %1043 = vmatpush1.msra.mxu0 0.0
        %1044 = vmatprep.subr.mxu0 0.0
        %1045 = vmatpush1.msra.mxu0 0.0
        %1046 = vmatprep.subr.mxu0 0.0
        %1047 = vmatpush1.msra.mxu0 0.0
        %1048 = vmatprep.subr.mxu0 0.0
        %1049 = vmatpush1.msra.mxu0 0.0
        %1050 = vmatprep.subr.mxu0 0.0
        %1051 = vmatpush1.msra.mxu0 0.0
        %1052 = vmatprep.subr.mxu0 0.0
        %1053 = vmatpush1.msra.mxu0 0.0
        %1054 = vmatprep.subr.mxu0 0.0
        %1055 = vmatpush1.msra.mxu0 0.0
        %1056 = vmatprep.subr.mxu0 0.0
        %1057 = vmatpush1.msra.mxu0 0.0
        %1058 = vmatprep.subr.mxu0 0.0
        %1059 = vmatpush1.msra.mxu0 0.0
        %1060 = vmatprep.subr.mxu0 0.0
        %1061 = vmatpush1.msra.mxu0 0.0
        %1062 = vmatprep.subr.mxu0 0.0
        %1063 = vmatpush1.msra.mxu0 0.0
        %1064 = vmatprep.subr.mxu0 0.0
        %1065 = vmatpush1.msra.mxu0 0.0
        %1066 = vmatprep.subr.mxu0 0.0
        %1067 = vmatpush1.msra.mxu0 0.0
        %1068 = vmatprep.subr.mxu0 0.0
        %1069 = vmatpush1.msra.mxu0 0.0
        %1070 = vmatprep.subr.mxu0 0.0
        %1071 = vmatpush1.msra.mxu0 0.0
        %1072 = vmatprep.subr.mxu0 0.0
        %1073 = vmatpush1.msra.mxu0 0.0
        %1074 = vmatprep.subr.mxu0 0.0
        %1075 = vmatpush1.msra.mxu0 0.0
        %1076 = vmatprep.subr.mxu0 0.0
        %1077 = vmatpush1.msra.mxu0 0.0
        %1078 = vmatprep.mubr.f32.mxu0 0.0
        %1079 = vmatmul.mubr.f32.gmra.mrb[0].mxu0 %v923
        %v1080 = vpop.f32.mrb[0].mxu0
        %v1081 = vadd.f32 0.0, %v1080
        %v1082 = vpop.f32.mrb[0].mxu0
        %1083 = vmatprep.mubr.f32.mxu0 0.0
        %1084 = vmatmul.mubr.f32.gmra.mrb[0].mxu0 %v926
        %v1085 = vpop.f32.mrb[0].mxu0
        %v1086 = vadd.f32 0.0, %v1085
        %v1087 = vpop.f32.mrb[0].mxu0
        %1088 = vmatprep.mubr.f32.mxu0 0.0
        %1089 = vmatmul.mubr.f32.gmra.mrb[0].mxu0 %v929
        %v1090 = vpop.f32.mrb[0].mxu0
        %v1091 = vadd.f32 0.0, %v1090
        %v1092 = vpop.f32.mrb[0].mxu0
        %1093 = vdwg.mxu0
        %v1094 = vadd.f32 %v765, %v998
        %v1095 = vadd.f32 %v767, %v1000
        %v1096 = vadd.f32 %v848, %v1081
        %v1097 = vadd.f32 %v771, %v1004
        %v1098 = vadd.f32 %v773, %v1006
        %v1099 = vadd.f32 %v853, %v1086
        %v1100 = vadd.f32 %v777, %v1010
        %v1101 = vadd.f32 %v779, %v1012
        %v1102 = vadd.f32 %v858, %v1091
        %s1103 = scalar_lea.vmem [#allocation7], 72
        %v1104 = vld [vmem:[%s1103] sm:$0xff]
        %v1105 = vld [vmem:[%s1103 + $0x8] sm:$0xff]
        %v1106 = vld [vmem:[%s1103 + $0x10] sm:$0xff]
        %1107 = vrot.lane.b32.xlu0 %v423, 110
        %v1108 = vpop.permute.xlu0 %1107
        %1109 = vrot.lane.b32.xlu0 %v424, 110
        %v1110 = vpop.permute.xlu0 %1109
        %1111 = vrot.lane.b32.xlu0 %v425, 110
        %v1112 = vpop.permute.xlu0 %1111
        %1113 = vrot.lane.b32.xlu0 %v426, 110
        %v1114 = vpop.permute.xlu0 %1113
        %1115 = vrot.lane.b32.xlu0 %v427, 110
        %v1116 = vpop.permute.xlu0 %1115
        %1117 = vrot.lane.b32.xlu0 %v428, 110
        %v1118 = vpop.permute.xlu0 %1117
        %1119 = vrot.lane.b32.xlu0 %v429, 110
        %v1120 = vpop.permute.xlu0 %1119
        %1121 = vrot.lane.b32.xlu0 %v430, 110
        %v1122 = vpop.permute.xlu0 %1121
        %1123 = vrot.lane.b32.xlu0 %v431, 110
        %v1124 = vpop.permute.xlu0 %1123
        %1125 = vrot.lane.b32.xlu0 %v432, 110
        %v1126 = vpop.permute.xlu0 %1125
        %1127 = vrot.lane.b32.xlu0 %v433, 110
        %v1128 = vpop.permute.xlu0 %1127
        %1129 = vrot.lane.b32.xlu0 %v434, 110
        %v1130 = vpop.permute.xlu0 %1129
        %1131 = vrot.lane.b32.xlu0 %v435, 110
        %v1132 = vpop.permute.xlu0 %1131
        %1133 = vrot.lane.b32.xlu0 %v436, 110
        %v1134 = vpop.permute.xlu0 %1133
        %1135 = vrot.lane.b32.xlu0 %v437, 110
        %v1136 = vpop.permute.xlu0 %1135
        %1137 = vrot.lane.b32.xlu0 %v438, 110
        %v1138 = vpop.permute.xlu0 %1137
        %vm1139 = vcmask 900096
        %v1140 = vsel %vm1139, %v1108, %v1110
        %v1141 = vsel %vm1139, %v1110, %v1112
        %v1142 = vsel %vm1139, %v1112, %v1114
        %v1143 = vsel %vm1139, %v1116, %v1118
        %v1144 = vsel %vm1139, %v1118, %v1120
        %v1145 = vsel %vm1139, %v1120, %v1122
        %v1146 = vsel %vm1139, %v1124, %v1126
        %v1147 = vsel %vm1139, %v1126, %v1128
        %v1148 = vsel %vm1139, %v1128, %v1130
        %v1149 = vsel %vm1139, %v1132, %v1134
        %v1150 = vsel %vm1139, %v1134, %v1136
        %v1151 = vsel %vm1139, %v1136, %v1138
        %v1165 = vsel %vm516, %v1104, 0
        %v1168 = vsel %vm516, %v1105, 0
        %v1171 = vsel %vm516, %v1106, 0
        %1173 = vmatprep.subr.mxu0 %v1141
        %1174 = vmatpush1.msra.mxu0 %v1140
        %1175 = vmatprep.subr.mxu0 %v1144
        %1176 = vmatpush1.msra.mxu0 %v1143
        %1177 = vmatprep.subr.mxu0 %v1147
        %1178 = vmatpush1.msra.mxu0 %v1146
        %1179 = vmatprep.subr.mxu0 %v1150
        %1180 = vmatpush1.msra.mxu0 %v1149
        %1181 = vmatprep.subr.mxu0 0.0
        %1182 = vmatpush1.msra.mxu0 0.0
        %1183 = vmatprep.subr.mxu0 0.0
        %1184 = vmatpush1.msra.mxu0 0.0
        %1185 = vmatprep.subr.mxu0 0.0
        %1186 = vmatpush1.msra.mxu0 0.0
        %1187 = vmatprep.subr.mxu0 0.0
        %1188 = vmatpush1.msra.mxu0 0.0
        %1189 = vmatprep.subr.mxu0 0.0
        %1190 = vmatpush1.msra.mxu0 0.0
        %1191 = vmatprep.subr.mxu0 0.0
        %1192 = vmatpush1.msra.mxu0 0.0
        %1193 = vmatprep.subr.mxu0 0.0
        %1194 = vmatpush1.msra.mxu0 0.0
        %1195 = vmatprep.subr.mxu0 0.0
        %1196 = vmatpush1.msra.mxu0 0.0
        %1197 = vmatprep.subr.mxu0 0.0
        %1198 = vmatpush1.msra.mxu0 0.0
        %1199 = vmatprep.subr.mxu0 0.0
        %1200 = vmatpush1.msra.mxu0 0.0
        %1201 = vmatprep.subr.mxu0 0.0
        %1202 = vmatpush1.msra.mxu0 0.0
        %1203 = vmatprep.subr.mxu0 0.0
        %1204 = vmatpush1.msra.mxu0 0.0
        %1205 = vmatprep.subr.mxu0 0.0
        %1206 = vmatpush1.msra.mxu0 0.0
        %1207 = vmatprep.subr.mxu0 0.0
        %1208 = vmatpush1.msra.mxu0 0.0
        %1209 = vmatprep.subr.mxu0 0.0
        %1210 = vmatpush1.msra.mxu0 0.0
        %1211 = vmatprep.subr.mxu0 0.0
        %1212 = vmatpush1.msra.mxu0 0.0
        %1213 = vmatprep.subr.mxu0 0.0
        %1214 = vmatpush1.msra.mxu0 0.0
        %1215 = vmatprep.subr.mxu0 0.0
        %1216 = vmatpush1.msra.mxu0 0.0
        %1217 = vmatprep.subr.mxu0 0.0
        %1218 = vmatpush1.msra.mxu0 0.0
        %1219 = vmatprep.subr.mxu0 0.0
        %1220 = vmatpush1.msra.mxu0 0.0
        %1221 = vmatprep.subr.mxu0 0.0
        %1222 = vmatpush1.msra.mxu0 0.0
        %1223 = vmatprep.subr.mxu0 0.0
        %1224 = vmatpush1.msra.mxu0 0.0
        %1225 = vmatprep.subr.mxu0 0.0
        %1226 = vmatpush1.msra.mxu0 0.0
        %1227 = vmatprep.subr.mxu0 0.0
        %1228 = vmatpush1.msra.mxu0 0.0
        %1229 = vmatprep.subr.mxu0 0.0
        %1230 = vmatpush1.msra.mxu0 0.0
        %1231 = vmatprep.subr.mxu0 0.0
        %1232 = vmatpush1.msra.mxu0 0.0
        %1233 = vmatprep.subr.mxu0 0.0
        %1234 = vmatpush1.msra.mxu0 0.0
        %1235 = vmatprep.subr.mxu0 0.0
        %1236 = vmatpush1.msra.mxu0 0.0
        %1237 = vmatprep.mubr.f32.mxu0 0.0
        %1238 = vmatmul.mubr.f32.gmra.mrb[0].mxu0 %v1165
        %v1239 = vpop.f32.mrb[0].mxu0
        %v1240 = vadd.f32 0.0, %v1239
        %v1241 = vpop.f32.mrb[0].mxu0
        %v1242 = vadd.f32 0.0, %v1241
        %1243 = vmatprep.mubr.f32.mxu0 0.0
        %1244 = vmatmul.mubr.f32.gmra.mrb[0].mxu0 %v1168
        %v1245 = vpop.f32.mrb[0].mxu0
        %v1246 = vadd.f32 0.0, %v1245
        %v1247 = vpop.f32.mrb[0].mxu0
        %v1248 = vadd.f32 0.0, %v1247
        %1249 = vmatprep.mubr.f32.mxu0 0.0
        %1250 = vmatmul.mubr.f32.gmra.mrb[0].mxu0 %v1171
        %v1251 = vpop.f32.mrb[0].mxu0
        %v1252 = vadd.f32 0.0, %v1251
        %v1253 = vpop.f32.mrb[0].mxu0
        %v1254 = vadd.f32 0.0, %v1253
        %1255 = vdwg.mxu0
        %1256 = vmatprep.subr.mxu0 0.0
        %1257 = vmatpush1.msra.mxu0 %v1142
        %1258 = vmatprep.subr.mxu0 0.0
        %1259 = vmatpush1.msra.mxu0 %v1145
        %1260 = vmatprep.subr.mxu0 0.0
        %1261 = vmatpush1.msra.mxu0 %v1148
        %1262 = vmatprep.subr.mxu0 0.0
        %1263 = vmatpush1.msra.mxu0 %v1151
        %1264 = vmatprep.subr.mxu0 0.0
        %1265 = vmatpush1.msra.mxu0 0.0
        %1266 = vmatprep.subr.mxu0 0.0
        %1267 = vmatpush1.msra.mxu0 0.0
        %1268 = vmatprep.subr.mxu0 0.0
        %1269 = vmatpush1.msra.mxu0 0.0
        %1270 = vmatprep.subr.mxu0 0.0
        %1271 = vmatpush1.msra.mxu0 0.0
        %1272 = vmatprep.subr.mxu0 0.0
        %1273 = vmatpush1.msra.mxu0 0.0
        %1274 = vmatprep.subr.mxu0 0.0
        %1275 = vmatpush1.msra.mxu0 0.0
        %1276 = vmatprep.subr.mxu0 0.0
        %1277 = vmatpush1.msra.mxu0 0.0
        %1278 = vmatprep.subr.mxu0 0.0
        %1279 = vmatpush1.msra.mxu0 0.0
        %1280 = vmatprep.subr.mxu0 0.0
        %1281 = vmatpush1.msra.mxu0 0.0
        %1282 = vmatprep.subr.mxu0 0.0
        %1283 = vmatpush1.msra.mxu0 0.0
        %1284 = vmatprep.subr.mxu0 0.0
        %1285 = vmatpush1.msra.mxu0 0.0
        %1286 = vmatprep.subr.mxu0 0.0
        %1287 = vmatpush1.msra.mxu0 0.0
        %1288 = vmatprep.subr.mxu0 0.0
        %1289 = vmatpush1.msra.mxu0 0.0
        %1290 = vmatprep.subr.mxu0 0.0
        %1291 = vmatpush1.msra.mxu0 0.0
        %1292 = vmatprep.subr.mxu0 0.0
        %1293 = vmatpush1.msra.mxu0 0.0
        %1294 = vmatprep.subr.mxu0 0.0
        %1295 = vmatpush1.msra.mxu0 0.0
        %1296 = vmatprep.subr.mxu0 0.0
        %1297 = vmatpush1.msra.mxu0 0.0
        %1298 = vmatprep.subr.mxu0 0.0
        %1299 = vmatpush1.msra.mxu0 0.0
        %1300 = vmatprep.subr.mxu0 0.0
        %1301 = vmatpush1.msra.mxu0 0.0
        %1302 = vmatprep.subr.mxu0 0.0
        %1303 = vmatpush1.msra.mxu0 0.0
        %1304 = vmatprep.subr.mxu0 0.0
        %1305 = vmatpush1.msra.mxu0 0.0
        %1306 = vmatprep.subr.mxu0 0.0
        %1307 = vmatpush1.msra.mxu0 0.0
        %1308 = vmatprep.subr.mxu0 0.0
        %1309 = vmatpush1.msra.mxu0 0.0
        %1310 = vmatprep.subr.mxu0 0.0
        %1311 = vmatpush1.msra.mxu0 0.0
        %1312 = vmatprep.subr.mxu0 0.0
        %1313 = vmatpush1.msra.mxu0 0.0
        %1314 = vmatprep.subr.mxu0 0.0
        %1315 = vmatpush1.msra.mxu0 0.0
        %1316 = vmatprep.subr.mxu0 0.0
        %1317 = vmatpush1.msra.mxu0 0.0
        %1318 = vmatprep.subr.mxu0 0.0
        %1319 = vmatpush1.msra.mxu0 0.0
        %1320 = vmatprep.mubr.f32.mxu0 0.0
        %1321 = vmatmul.mubr.f32.gmra.mrb[0].mxu0 %v1165
        %v1322 = vpop.f32.mrb[0].mxu0
        %v1323 = vadd.f32 0.0, %v1322
        %v1324 = vpop.f32.mrb[0].mxu0
        %1325 = vmatprep.mubr.f32.mxu0 0.0
        %1326 = vmatmul.mubr.f32.gmra.mrb[0].mxu0 %v1168
        %v1327 = vpop.f32.mrb[0].mxu0
        %v1328 = vadd.f32 0.0, %v1327
        %v1329 = vpop.f32.mrb[0].mxu0
        %1330 = vmatprep.mubr.f32.mxu0 0.0
        %1331 = vmatmul.mubr.f32.gmra.mrb[0].mxu0 %v1171
        %v1332 = vpop.f32.mrb[0].mxu0
        %v1333 = vadd.f32 0.0, %v1332
        %v1334 = vpop.f32.mrb[0].mxu0
        %1335 = vdwg.mxu0
        %v1336 = vadd.f32 %v1094, %v1240
        %v1337 = vadd.f32 %v1095, %v1242
        %v1338 = vadd.f32 %v1096, %v1323
        %v1339 = vadd.f32 %v1097, %v1246
        %v1340 = vadd.f32 %v1098, %v1248
        %v1341 = vadd.f32 %v1099, %v1328
        %v1342 = vadd.f32 %v1100, %v1252
        %v1343 = vadd.f32 %v1101, %v1254
        %v1344 = vadd.f32 %v1102, %v1333
        %s1345 = scalar_lea.vmem [#allocation7], 96
        %v1346 = vld [vmem:[%s1345] sm:$0xff]
        %v1347 = vld [vmem:[%s1345 + $0x8] sm:$0xff]
        %v1348 = vld [vmem:[%s1345 + $0x10] sm:$0xff]
        %1349 = vrot.lane.b32.xlu0 %v423, 109
        %v1350 = vpop.permute.xlu0 %1349
        %1351 = vrot.lane.b32.xlu0 %v424, 109
        %v1352 = vpop.permute.xlu0 %1351
        %1353 = vrot.lane.b32.xlu0 %v425, 109
        %v1354 = vpop.permute.xlu0 %1353
        %1355 = vrot.lane.b32.xlu0 %v426, 109
        %v1356 = vpop.permute.xlu0 %1355
        %1357 = vrot.lane.b32.xlu0 %v427, 109
        %v1358 = vpop.permute.xlu0 %1357
        %1359 = vrot.lane.b32.xlu0 %v428, 109
        %v1360 = vpop.permute.xlu0 %1359
        %1361 = vrot.lane.b32.xlu0 %v429, 109
        %v1362 = vpop.permute.xlu0 %1361
        %1363 = vrot.lane.b32.xlu0 %v430, 109
        %v1364 = vpop.permute.xlu0 %1363
        %1365 = vrot.lane.b32.xlu0 %v431, 109
        %v1366 = vpop.permute.xlu0 %1365
        %1367 = vrot.lane.b32.xlu0 %v432, 109
        %v1368 = vpop.permute.xlu0 %1367
        %1369 = vrot.lane.b32.xlu0 %v433, 109
        %v1370 = vpop.permute.xlu0 %1369
        %1371 = vrot.lane.b32.xlu0 %v434, 109
        %v1372 = vpop.permute.xlu0 %1371
        %1373 = vrot.lane.b32.xlu0 %v435, 109
        %v1374 = vpop.permute.xlu0 %1373
        %1375 = vrot.lane.b32.xlu0 %v436, 109
        %v1376 = vpop.permute.xlu0 %1375
        %1377 = vrot.lane.b32.xlu0 %v437, 109
        %v1378 = vpop.permute.xlu0 %1377
        %1379 = vrot.lane.b32.xlu0 %v438, 109
        %v1380 = vpop.permute.xlu0 %1379
        %vm1381 = vcmask 891904
        %v1382 = vsel %vm1381, %v1350, %v1352
        %v1383 = vsel %vm1381, %v1352, %v1354
        %v1384 = vsel %vm1381, %v1354, %v1356
        %v1385 = vsel %vm1381, %v1358, %v1360
        %v1386 = vsel %vm1381, %v1360, %v1362
        %v1387 = vsel %vm1381, %v1362, %v1364
        %v1388 = vsel %vm1381, %v1366, %v1368
        %v1389 = vsel %vm1381, %v1368, %v1370
        %v1390 = vsel %vm1381, %v1370, %v1372
        %v1391 = vsel %vm1381, %v1374, %v1376
        %v1392 = vsel %vm1381, %v1376, %v1378
        %v1393 = vsel %vm1381, %v1378, %v1380
        %v1407 = vsel %vm516, %v1346, 0
        %v1410 = vsel %vm516, %v1347, 0
        %v1413 = vsel %vm516, %v1348, 0
        %1415 = vmatprep.subr.mxu0 %v1383
        %1416 = vmatpush1.msra.mxu0 %v1382
        %1417 = vmatprep.subr.mxu0 %v1386
        %1418 = vmatpush1.msra.mxu0 %v1385
        %1419 = vmatprep.subr.mxu0 %v1389
        %1420 = vmatpush1.msra.mxu0 %v1388
        %1421 = vmatprep.subr.mxu0 %v1392
        %1422 = vmatpush1.msra.mxu0 %v1391
        %1423 = vmatprep.subr.mxu0 0.0
        %1424 = vmatpush1.msra.mxu0 0.0
        %1425 = vmatprep.subr.mxu0 0.0
        %1426 = vmatpush1.msra.mxu0 0.0
        %1427 = vmatprep.subr.mxu0 0.0
        %1428 = vmatpush1.msra.mxu0 0.0
        %1429 = vmatprep.subr.mxu0 0.0
        %1430 = vmatpush1.msra.mxu0 0.0
        %1431 = vmatprep.subr.mxu0 0.0
        %1432 = vmatpush1.msra.mxu0 0.0
        %1433 = vmatprep.subr.mxu0 0.0
        %1434 = vmatpush1.msra.mxu0 0.0
        %1435 = vmatprep.subr.mxu0 0.0
        %1436 = vmatpush1.msra.mxu0 0.0
        %1437 = vmatprep.subr.mxu0 0.0
        %1438 = vmatpush1.msra.mxu0 0.0
        %1439 = vmatprep.subr.mxu0 0.0
        %1440 = vmatpush1.msra.mxu0 0.0
        %1441 = vmatprep.subr.mxu0 0.0
        %1442 = vmatpush1.msra.mxu0 0.0
        %1443 = vmatprep.subr.mxu0 0.0
        %1444 = vmatpush1.msra.mxu0 0.0
        %1445 = vmatprep.subr.mxu0 0.0
        %1446 = vmatpush1.msra.mxu0 0.0
        %1447 = vmatprep.subr.mxu0 0.0
        %1448 = vmatpush1.msra.mxu0 0.0
        %1449 = vmatprep.subr.mxu0 0.0
        %1450 = vmatpush1.msra.mxu0 0.0
        %1451 = vmatprep.subr.mxu0 0.0
        %1452 = vmatpush1.msra.mxu0 0.0
        %1453 = vmatprep.subr.mxu0 0.0
        %1454 = vmatpush1.msra.mxu0 0.0
        %1455 = vmatprep.subr.mxu0 0.0
        %1456 = vmatpush1.msra.mxu0 0.0
        %1457 = vmatprep.subr.mxu0 0.0
        %1458 = vmatpush1.msra.mxu0 0.0
        %1459 = vmatprep.subr.mxu0 0.0
        %1460 = vmatpush1.msra.mxu0 0.0
        %1461 = vmatprep.subr.mxu0 0.0
        %1462 = vmatpush1.msra.mxu0 0.0
        %1463 = vmatprep.subr.mxu0 0.0
        %1464 = vmatpush1.msra.mxu0 0.0
        %1465 = vmatprep.subr.mxu0 0.0
        %1466 = vmatpush1.msra.mxu0 0.0
        %1467 = vmatprep.subr.mxu0 0.0
        %1468 = vmatpush1.msra.mxu0 0.0
        %1469 = vmatprep.subr.mxu0 0.0
        %1470 = vmatpush1.msra.mxu0 0.0
        %1471 = vmatprep.subr.mxu0 0.0
        %1472 = vmatpush1.msra.mxu0 0.0
        %1473 = vmatprep.subr.mxu0 0.0
        %1474 = vmatpush1.msra.mxu0 0.0
        %1475 = vmatprep.subr.mxu0 0.0
        %1476 = vmatpush1.msra.mxu0 0.0
        %1477 = vmatprep.subr.mxu0 0.0
        %1478 = vmatpush1.msra.mxu0 0.0
        %1479 = vmatprep.mubr.f32.mxu0 0.0
        %1480 = vmatmul.mubr.f32.gmra.mrb[0].mxu0 %v1407
        %v1481 = vpop.f32.mrb[0].mxu0
        %v1482 = vadd.f32 0.0, %v1481
        %v1483 = vpop.f32.mrb[0].mxu0
        %v1484 = vadd.f32 0.0, %v1483
        %1485 = vmatprep.mubr.f32.mxu0 0.0
        %1486 = vmatmul.mubr.f32.gmra.mrb[0].mxu0 %v1410
        %v1487 = vpop.f32.mrb[0].mxu0
        %v1488 = vadd.f32 0.0, %v1487
        %v1489 = vpop.f32.mrb[0].mxu0
        %v1490 = vadd.f32 0.0, %v1489
        %1491 = vmatprep.mubr.f32.mxu0 0.0
        %1492 = vmatmul.mubr.f32.gmra.mrb[0].mxu0 %v1413
        %v1493 = vpop.f32.mrb[0].mxu0
        %v1494 = vadd.f32 0.0, %v1493
        %v1495 = vpop.f32.mrb[0].mxu0
        %v1496 = vadd.f32 0.0, %v1495
        %1497 = vdwg.mxu0
        %1498 = vmatprep.subr.mxu0 0.0
        %1499 = vmatpush1.msra.mxu0 %v1384
        %1500 = vmatprep.subr.mxu0 0.0
        %1501 = vmatpush1.msra.mxu0 %v1387
        %1502 = vmatprep.subr.mxu0 0.0
        %1503 = vmatpush1.msra.mxu0 %v1390
        %1504 = vmatprep.subr.mxu0 0.0
        %1505 = vmatpush1.msra.mxu0 %v1393
        %1506 = vmatprep.subr.mxu0 0.0
        %1507 = vmatpush1.msra.mxu0 0.0
        %1508 = vmatprep.subr.mxu0 0.0
        %1509 = vmatpush1.msra.mxu0 0.0
        %1510 = vmatprep.subr.mxu0 0.0
        %1511 = vmatpush1.msra.mxu0 0.0
        %1512 = vmatprep.subr.mxu0 0.0
        %1513 = vmatpush1.msra.mxu0 0.0
        %1514 = vmatprep.subr.mxu0 0.0
        %1515 = vmatpush1.msra.mxu0 0.0
        %1516 = vmatprep.subr.mxu0 0.0
        %1517 = vmatpush1.msra.mxu0 0.0
        %1518 = vmatprep.subr.mxu0 0.0
        %1519 = vmatpush1.msra.mxu0 0.0
        %1520 = vmatprep.subr.mxu0 0.0
        %1521 = vmatpush1.msra.mxu0 0.0
        %1522 = vmatprep.subr.mxu0 0.0
        %1523 = vmatpush1.msra.mxu0 0.0
        %1524 = vmatprep.subr.mxu0 0.0
        %1525 = vmatpush1.msra.mxu0 0.0
        %1526 = vmatprep.subr.mxu0 0.0
        %1527 = vmatpush1.msra.mxu0 0.0
        %1528 = vmatprep.subr.mxu0 0.0
        %1529 = vmatpush1.msra.mxu0 0.0
        %1530 = vmatprep.subr.mxu0 0.0
        %1531 = vmatpush1.msra.mxu0 0.0
        %1532 = vmatprep.subr.mxu0 0.0
        %1533 = vmatpush1.msra.mxu0 0.0
        %1534 = vmatprep.subr.mxu0 0.0
        %1535 = vmatpush1.msra.mxu0 0.0
        %1536 = vmatprep.subr.mxu0 0.0
        %1537 = vmatpush1.msra.mxu0 0.0
        %1538 = vmatprep.subr.mxu0 0.0
        %1539 = vmatpush1.msra.mxu0 0.0
        %1540 = vmatprep.subr.mxu0 0.0
        %1541 = vmatpush1.msra.mxu0 0.0
        %1542 = vmatprep.subr.mxu0 0.0
        %1543 = vmatpush1.msra.mxu0 0.0
        %1544 = vmatprep.subr.mxu0 0.0
        %1545 = vmatpush1.msra.mxu0 0.0
        %1546 = vmatprep.subr.mxu0 0.0
        %1547 = vmatpush1.msra.mxu0 0.0
        %1548 = vmatprep.subr.mxu0 0.0
        %1549 = vmatpush1.msra.mxu0 0.0
        %1550 = vmatprep.subr.mxu0 0.0
        %1551 = vmatpush1.msra.mxu0 0.0
        %1552 = vmatprep.subr.mxu0 0.0
        %1553 = vmatpush1.msra.mxu0 0.0
        %1554 = vmatprep.subr.mxu0 0.0
        %1555 = vmatpush1.msra.mxu0 0.0
        %1556 = vmatprep.subr.mxu0 0.0
        %1557 = vmatpush1.msra.mxu0 0.0
        %1558 = vmatprep.subr.mxu0 0.0
        %1559 = vmatpush1.msra.mxu0 0.0
        %1560 = vmatprep.subr.mxu0 0.0
        %1561 = vmatpush1.msra.mxu0 0.0
        %1562 = vmatprep.mubr.f32.mxu0 0.0
        %1563 = vmatmul.mubr.f32.gmra.mrb[0].mxu0 %v1407
        %v1564 = vpop.f32.mrb[0].mxu0
        %v1565 = vadd.f32 0.0, %v1564
        %v1566 = vpop.f32.mrb[0].mxu0
        %1567 = vmatprep.mubr.f32.mxu0 0.0
        %1568 = vmatmul.mubr.f32.gmra.mrb[0].mxu0 %v1410
        %v1569 = vpop.f32.mrb[0].mxu0
        %v1570 = vadd.f32 0.0, %v1569
        %v1571 = vpop.f32.mrb[0].mxu0
        %1572 = vmatprep.mubr.f32.mxu0 0.0
        %1573 = vmatmul.mubr.f32.gmra.mrb[0].mxu0 %v1413
        %v1574 = vpop.f32.mrb[0].mxu0
        %v1575 = vadd.f32 0.0, %v1574
        %v1576 = vpop.f32.mrb[0].mxu0
        %1577 = vdwg.mxu0
        %v1578 = vadd.f32 %v1336, %v1482
        %v1579 = vadd.f32 %v1337, %v1484
        %v1580 = vadd.f32 %v1338, %v1565
        %v1581 = vadd.f32 %v1339, %v1488
        %v1582 = vadd.f32 %v1340, %v1490
        %v1583 = vadd.f32 %v1341, %v1570
        %v1584 = vadd.f32 %v1342, %v1494
        %v1585 = vadd.f32 %v1343, %v1496
        %v1586 = vadd.f32 %v1344, %v1575
        %s1587 = scalar_lea.vmem [#allocation7], 120
        %v1588 = vld [vmem:[%s1587] sm:$0xff]
        %v1589 = vld [vmem:[%s1587 + $0x8] sm:$0xff]
        %v1590 = vld [vmem:[%s1587 + $0x10] sm:$0xff]
        %1591 = vrot.lane.b32.xlu0 %v423, 108
        %v1592 = vpop.permute.xlu0 %1591
        %1593 = vrot.lane.b32.xlu0 %v424, 108
        %v1594 = vpop.permute.xlu0 %1593
        %1595 = vrot.lane.b32.xlu0 %v425, 108
        %v1596 = vpop.permute.xlu0 %1595
        %1597 = vrot.lane.b32.xlu0 %v426, 108
        %v1598 = vpop.permute.xlu0 %1597
        %1599 = vrot.lane.b32.xlu0 %v427, 108
        %v1600 = vpop.permute.xlu0 %1599
        %1601 = vrot.lane.b32.xlu0 %v428, 108
        %v1602 = vpop.permute.xlu0 %1601
        %1603 = vrot.lane.b32.xlu0 %v429, 108
        %v1604 = vpop.permute.xlu0 %1603
        %1605 = vrot.lane.b32.xlu0 %v430, 108
        %v1606 = vpop.permute.xlu0 %1605
        %1607 = vrot.lane.b32.xlu0 %v431, 108
        %v1608 = vpop.permute.xlu0 %1607
        %1609 = vrot.lane.b32.xlu0 %v432, 108
        %v1610 = vpop.permute.xlu0 %1609
        %1611 = vrot.lane.b32.xlu0 %v433, 108
        %v1612 = vpop.permute.xlu0 %1611
        %1613 = vrot.lane.b32.xlu0 %v434, 108
        %v1614 = vpop.permute.xlu0 %1613
        %1615 = vrot.lane.b32.xlu0 %v435, 108
        %v1616 = vpop.permute.xlu0 %1615
        %1617 = vrot.lane.b32.xlu0 %v436, 108
        %v1618 = vpop.permute.xlu0 %1617
        %1619 = vrot.lane.b32.xlu0 %v437, 108
        %v1620 = vpop.permute.xlu0 %1619
        %1621 = vrot.lane.b32.xlu0 %v438, 108
        %v1622 = vpop.permute.xlu0 %1621
        %vm1623 = vcmask 883712
        %v1624 = vsel %vm1623, %v1592, %v1594
        %v1625 = vsel %vm1623, %v1594, %v1596
        %v1626 = vsel %vm1623, %v1596, %v1598
        %v1627 = vsel %vm1623, %v1600, %v1602
        %v1628 = vsel %vm1623, %v1602, %v1604
        %v1629 = vsel %vm1623, %v1604, %v1606
        %v1630 = vsel %vm1623, %v1608, %v1610
        %v1631 = vsel %vm1623, %v1610, %v1612
        %v1632 = vsel %vm1623, %v1612, %v1614
        %v1633 = vsel %vm1623, %v1616, %v1618
        %v1634 = vsel %vm1623, %v1618, %v1620
        %v1635 = vsel %vm1623, %v1620, %v1622
        %v1649 = vsel %vm516, %v1588, 0
        %v1652 = vsel %vm516, %v1589, 0
        %v1655 = vsel %vm516, %v1590, 0
        %1657 = vmatprep.subr.mxu0 %v1625
        %1658 = vmatpush1.msra.mxu0 %v1624
        %1659 = vmatprep.subr.mxu0 %v1628
        %1660 = vmatpush1.msra.mxu0 %v1627
        %1661 = vmatprep.subr.mxu0 %v1631
        %1662 = vmatpush1.msra.mxu0 %v1630
        %1663 = vmatprep.subr.mxu0 %v1634
        %1664 = vmatpush1.msra.mxu0 %v1633
        %1665 = vmatprep.subr.mxu0 0.0
        %1666 = vmatpush1.msra.mxu0 0.0
        %1667 = vmatprep.subr.mxu0 0.0
        %1668 = vmatpush1.msra.mxu0 0.0
        %1669 = vmatprep.subr.mxu0 0.0
        %1670 = vmatpush1.msra.mxu0 0.0
        %1671 = vmatprep.subr.mxu0 0.0
        %1672 = vmatpush1.msra.mxu0 0.0
        %1673 = vmatprep.subr.mxu0 0.0
        %1674 = vmatpush1.msra.mxu0 0.0
        %1675 = vmatprep.subr.mxu0 0.0
        %1676 = vmatpush1.msra.mxu0 0.0
        %1677 = vmatprep.subr.mxu0 0.0
        %1678 = vmatpush1.msra.mxu0 0.0
        %1679 = vmatprep.subr.mxu0 0.0
        %1680 = vmatpush1.msra.mxu0 0.0
        %1681 = vmatprep.subr.mxu0 0.0
        %1682 = vmatpush1.msra.mxu0 0.0
        %1683 = vmatprep.subr.mxu0 0.0
        %1684 = vmatpush1.msra.mxu0 0.0
        %1685 = vmatprep.subr.mxu0 0.0
        %1686 = vmatpush1.msra.mxu0 0.0
        %1687 = vmatprep.subr.mxu0 0.0
        %1688 = vmatpush1.msra.mxu0 0.0
        %1689 = vmatprep.subr.mxu0 0.0
        %1690 = vmatpush1.msra.mxu0 0.0
        %1691 = vmatprep.subr.mxu0 0.0
        %1692 = vmatpush1.msra.mxu0 0.0
        %1693 = vmatprep.subr.mxu0 0.0
        %1694 = vmatpush1.msra.mxu0 0.0
        %1695 = vmatprep.subr.mxu0 0.0
        %1696 = vmatpush1.msra.mxu0 0.0
        %1697 = vmatprep.subr.mxu0 0.0
        %1698 = vmatpush1.msra.mxu0 0.0
        %1699 = vmatprep.subr.mxu0 0.0
        %1700 = vmatpush1.msra.mxu0 0.0
        %1701 = vmatprep.subr.mxu0 0.0
        %1702 = vmatpush1.msra.mxu0 0.0
        %1703 = vmatprep.subr.mxu0 0.0
        %1704 = vmatpush1.msra.mxu0 0.0
        %1705 = vmatprep.subr.mxu0 0.0
        %1706 = vmatpush1.msra.mxu0 0.0
        %1707 = vmatprep.subr.mxu0 0.0
        %1708 = vmatpush1.msra.mxu0 0.0
        %1709 = vmatprep.subr.mxu0 0.0
        %1710 = vmatpush1.msra.mxu0 0.0
        %1711 = vmatprep.subr.mxu0 0.0
        %1712 = vmatpush1.msra.mxu0 0.0
        %1713 = vmatprep.subr.mxu0 0.0
        %1714 = vmatpush1.msra.mxu0 0.0
        %1715 = vmatprep.subr.mxu0 0.0
        %1716 = vmatpush1.msra.mxu0 0.0
        %1717 = vmatprep.subr.mxu0 0.0
        %1718 = vmatpush1.msra.mxu0 0.0
        %1719 = vmatprep.subr.mxu0 0.0
        %1720 = vmatpush1.msra.mxu0 0.0
        %1721 = vmatprep.mubr.f32.mxu0 0.0
        %1722 = vmatmul.mubr.f32.gmra.mrb[0].mxu0 %v1649
        %v1723 = vpop.f32.mrb[0].mxu0
        %v1724 = vadd.f32 0.0, %v1723
        %v1725 = vpop.f32.mrb[0].mxu0
        %v1726 = vadd.f32 0.0, %v1725
        %1727 = vmatprep.mubr.f32.mxu0 0.0
        %1728 = vmatmul.mubr.f32.gmra.mrb[0].mxu0 %v1652
        %v1729 = vpop.f32.mrb[0].mxu0
        %v1730 = vadd.f32 0.0, %v1729
        %v1731 = vpop.f32.mrb[0].mxu0
        %v1732 = vadd.f32 0.0, %v1731
        %1733 = vmatprep.mubr.f32.mxu0 0.0
        %1734 = vmatmul.mubr.f32.gmra.mrb[0].mxu0 %v1655
        %v1735 = vpop.f32.mrb[0].mxu0
        %v1736 = vadd.f32 0.0, %v1735
        %v1737 = vpop.f32.mrb[0].mxu0
        %v1738 = vadd.f32 0.0, %v1737
        %1739 = vdwg.mxu0
        %1740 = vmatprep.subr.mxu0 0.0
        %1741 = vmatpush1.msra.mxu0 %v1626
        %1742 = vmatprep.subr.mxu0 0.0
        %1743 = vmatpush1.msra.mxu0 %v1629
        %1744 = vmatprep.subr.mxu0 0.0
        %1745 = vmatpush1.msra.mxu0 %v1632
        %1746 = vmatprep.subr.mxu0 0.0
        %1747 = vmatpush1.msra.mxu0 %v1635
        %1748 = vmatprep.subr.mxu0 0.0
        %1749 = vmatpush1.msra.mxu0 0.0
        %1750 = vmatprep.subr.mxu0 0.0
        %1751 = vmatpush1.msra.mxu0 0.0
        %1752 = vmatprep.subr.mxu0 0.0
        %1753 = vmatpush1.msra.mxu0 0.0
        %1754 = vmatprep.subr.mxu0 0.0
        %1755 = vmatpush1.msra.mxu0 0.0
        %1756 = vmatprep.subr.mxu0 0.0
        %1757 = vmatpush1.msra.mxu0 0.0
        %1758 = vmatprep.subr.mxu0 0.0
        %1759 = vmatpush1.msra.mxu0 0.0
        %1760 = vmatprep.subr.mxu0 0.0
        %1761 = vmatpush1.msra.mxu0 0.0
        %1762 = vmatprep.subr.mxu0 0.0
        %1763 = vmatpush1.msra.mxu0 0.0
        %1764 = vmatprep.subr.mxu0 0.0
        %1765 = vmatpush1.msra.mxu0 0.0
        %1766 = vmatprep.subr.mxu0 0.0
        %1767 = vmatpush1.msra.mxu0 0.0
        %1768 = vmatprep.subr.mxu0 0.0
        %1769 = vmatpush1.msra.mxu0 0.0
        %1770 = vmatprep.subr.mxu0 0.0
        %1771 = vmatpush1.msra.mxu0 0.0
        %1772 = vmatprep.subr.mxu0 0.0
        %1773 = vmatpush1.msra.mxu0 0.0
        %1774 = vmatprep.subr.mxu0 0.0
        %1775 = vmatpush1.msra.mxu0 0.0
        %1776 = vmatprep.subr.mxu0 0.0
        %1777 = vmatpush1.msra.mxu0 0.0
        %1778 = vmatprep.subr.mxu0 0.0
        %1779 = vmatpush1.msra.mxu0 0.0
        %1780 = vmatprep.subr.mxu0 0.0
        %1781 = vmatpush1.msra.mxu0 0.0
        %1782 = vmatprep.subr.mxu0 0.0
        %1783 = vmatpush1.msra.mxu0 0.0
        %1784 = vmatprep.subr.mxu0 0.0
        %1785 = vmatpush1.msra.mxu0 0.0
        %1786 = vmatprep.subr.mxu0 0.0
        %1787 = vmatpush1.msra.mxu0 0.0
        %1788 = vmatprep.subr.mxu0 0.0
        %1789 = vmatpush1.msra.mxu0 0.0
        %1790 = vmatprep.subr.mxu0 0.0
        %1791 = vmatpush1.msra.mxu0 0.0
        %1792 = vmatprep.subr.mxu0 0.0
        %1793 = vmatpush1.msra.mxu0 0.0
        %1794 = vmatprep.subr.mxu0 0.0
        %1795 = vmatpush1.msra.mxu0 0.0
        %1796 = vmatprep.subr.mxu0 0.0
        %1797 = vmatpush1.msra.mxu0 0.0
        %1798 = vmatprep.subr.mxu0 0.0
        %1799 = vmatpush1.msra.mxu0 0.0
        %1800 = vmatprep.subr.mxu0 0.0
        %1801 = vmatpush1.msra.mxu0 0.0
        %1802 = vmatprep.subr.mxu0 0.0
        %1803 = vmatpush1.msra.mxu0 0.0
        %1804 = vmatprep.mubr.f32.mxu0 0.0
        %1805 = vmatmul.mubr.f32.gmra.mrb[0].mxu0 %v1649
        %v1806 = vpop.f32.mrb[0].mxu0
        %v1807 = vadd.f32 0.0, %v1806
        %v1808 = vpop.f32.mrb[0].mxu0
        %1809 = vmatprep.mubr.f32.mxu0 0.0
        %1810 = vmatmul.mubr.f32.gmra.mrb[0].mxu0 %v1652
        %v1811 = vpop.f32.mrb[0].mxu0
        %v1812 = vadd.f32 0.0, %v1811
        %v1813 = vpop.f32.mrb[0].mxu0
        %1814 = vmatprep.mubr.f32.mxu0 0.0
        %1815 = vmatmul.mubr.f32.gmra.mrb[0].mxu0 %v1655
        %v1816 = vpop.f32.mrb[0].mxu0
        %v1817 = vadd.f32 0.0, %v1816
        %v1818 = vpop.f32.mrb[0].mxu0
        %1819 = vdwg.mxu0
        %v1820 = vadd.f32 %v1578, %v1724
        %v1821 = vadd.f32 %v1579, %v1726
        %v1822 = vadd.f32 %v1580, %v1807
        %v1823 = vadd.f32 %v1581, %v1730
        %v1824 = vadd.f32 %v1582, %v1732
        %v1825 = vadd.f32 %v1583, %v1812
        %v1826 = vadd.f32 %v1584, %v1736
        %v1827 = vadd.f32 %v1585, %v1738
        %v1828 = vadd.f32 %v1586, %v1817
        %s1829 = scalar_lea.vmem [#allocation7], 144
        %v1830 = vld [vmem:[%s1829] sm:$0xff]
        %v1831 = vld [vmem:[%s1829 + $0x8] sm:$0xff]
        %v1832 = vld [vmem:[%s1829 + $0x10] sm:$0xff]
        %1833 = vrot.lane.b32.xlu0 %v423, 92
        %v1834 = vpop.permute.xlu0 %1833
        %1835 = vrot.lane.b32.xlu0 %v424, 92
        %v1836 = vpop.permute.xlu0 %1835
        %1837 = vrot.lane.b32.xlu0 %v425, 92
        %v1838 = vpop.permute.xlu0 %1837
        %1839 = vrot.lane.b32.xlu0 %v426, 92
        %v1840 = vpop.permute.xlu0 %1839
        %1841 = vrot.lane.b32.xlu0 %v427, 92
        %v1842 = vpop.permute.xlu0 %1841
        %1843 = vrot.lane.b32.xlu0 %v428, 92
        %v1844 = vpop.permute.xlu0 %1843
        %1845 = vrot.lane.b32.xlu0 %v429, 92
        %v1846 = vpop.permute.xlu0 %1845
        %1847 = vrot.lane.b32.xlu0 %v430, 92
        %v1848 = vpop.permute.xlu0 %1847
        %1849 = vrot.lane.b32.xlu0 %v431, 92
        %v1850 = vpop.permute.xlu0 %1849
        %1851 = vrot.lane.b32.xlu0 %v432, 92
        %v1852 = vpop.permute.xlu0 %1851
        %1853 = vrot.lane.b32.xlu0 %v433, 92
        %v1854 = vpop.permute.xlu0 %1853
        %1855 = vrot.lane.b32.xlu0 %v434, 92
        %v1856 = vpop.permute.xlu0 %1855
        %1857 = vrot.lane.b32.xlu0 %v435, 92
        %v1858 = vpop.permute.xlu0 %1857
        %1859 = vrot.lane.b32.xlu0 %v436, 92
        %v1860 = vpop.permute.xlu0 %1859
        %1861 = vrot.lane.b32.xlu0 %v437, 92
        %v1862 = vpop.permute.xlu0 %1861
        %1863 = vrot.lane.b32.xlu0 %v438, 92
        %v1864 = vpop.permute.xlu0 %1863
        %vm1865 = vcmask 752640
        %v1866 = vsel %vm1865, %v1834, %v1836
        %v1867 = vsel %vm1865, %v1836, %v1838
        %v1868 = vsel %vm1865, %v1838, %v1840
        %v1869 = vsel %vm1865, %v1842, %v1844
        %v1870 = vsel %vm1865, %v1844, %v1846
        %v1871 = vsel %vm1865, %v1846, %v1848
        %v1872 = vsel %vm1865, %v1850, %v1852
        %v1873 = vsel %vm1865, %v1852, %v1854
        %v1874 = vsel %vm1865, %v1854, %v1856
        %v1875 = vsel %vm1865, %v1858, %v1860
        %v1876 = vsel %vm1865, %v1860, %v1862
        %v1877 = vsel %vm1865, %v1862, %v1864
        %v1891 = vsel %vm516, %v1830, 0
        %v1894 = vsel %vm516, %v1831, 0
        %v1897 = vsel %vm516, %v1832, 0
        %1899 = vmatprep.subr.mxu0 %v1867
        %1900 = vmatpush1.msra.mxu0 %v1866
        %1901 = vmatprep.subr.mxu0 %v1870
        %1902 = vmatpush1.msra.mxu0 %v1869
        %1903 = vmatprep.subr.mxu0 %v1873
        %1904 = vmatpush1.msra.mxu0 %v1872
        %1905 = vmatprep.subr.mxu0 %v1876
        %1906 = vmatpush1.msra.mxu0 %v1875
        %1907 = vmatprep.subr.mxu0 0.0
        %1908 = vmatpush1.msra.mxu0 0.0
        %1909 = vmatprep.subr.mxu0 0.0
        %1910 = vmatpush1.msra.mxu0 0.0
        %1911 = vmatprep.subr.mxu0 0.0
        %1912 = vmatpush1.msra.mxu0 0.0
        %1913 = vmatprep.subr.mxu0 0.0
        %1914 = vmatpush1.msra.mxu0 0.0
        %1915 = vmatprep.subr.mxu0 0.0
        %1916 = vmatpush1.msra.mxu0 0.0
        %1917 = vmatprep.subr.mxu0 0.0
        %1918 = vmatpush1.msra.mxu0 0.0
        %1919 = vmatprep.subr.mxu0 0.0
        %1920 = vmatpush1.msra.mxu0 0.0
        %1921 = vmatprep.subr.mxu0 0.0
        %1922 = vmatpush1.msra.mxu0 0.0
        %1923 = vmatprep.subr.mxu0 0.0
        %1924 = vmatpush1.msra.mxu0 0.0
        %1925 = vmatprep.subr.mxu0 0.0
        %1926 = vmatpush1.msra.mxu0 0.0
        %1927 = vmatprep.subr.mxu0 0.0
        %1928 = vmatpush1.msra.mxu0 0.0
        %1929 = vmatprep.subr.mxu0 0.0
        %1930 = vmatpush1.msra.mxu0 0.0
        %1931 = vmatprep.subr.mxu0 0.0
        %1932 = vmatpush1.msra.mxu0 0.0
        %1933 = vmatprep.subr.mxu0 0.0
        %1934 = vmatpush1.msra.mxu0 0.0
        %1935 = vmatprep.subr.mxu0 0.0
        %1936 = vmatpush1.msra.mxu0 0.0
        %1937 = vmatprep.subr.mxu0 0.0
        %1938 = vmatpush1.msra.mxu0 0.0
        %1939 = vmatprep.subr.mxu0 0.0
        %1940 = vmatpush1.msra.mxu0 0.0
        %1941 = vmatprep.subr.mxu0 0.0
        %1942 = vmatpush1.msra.mxu0 0.0
        %1943 = vmatprep.subr.mxu0 0.0
        %1944 = vmatpush1.msra.mxu0 0.0
        %1945 = vmatprep.subr.mxu0 0.0
        %1946 = vmatpush1.msra.mxu0 0.0
        %1947 = vmatprep.subr.mxu0 0.0
        %1948 = vmatpush1.msra.mxu0 0.0
        %1949 = vmatprep.subr.mxu0 0.0
        %1950 = vmatpush1.msra.mxu0 0.0
        %1951 = vmatprep.subr.mxu0 0.0
        %1952 = vmatpush1.msra.mxu0 0.0
        %1953 = vmatprep.subr.mxu0 0.0
        %1954 = vmatpush1.msra.mxu0 0.0
        %1955 = vmatprep.subr.mxu0 0.0
        %1956 = vmatpush1.msra.mxu0 0.0
        %1957 = vmatprep.subr.mxu0 0.0
        %1958 = vmatpush1.msra.mxu0 0.0
        %1959 = vmatprep.subr.mxu0 0.0
        %1960 = vmatpush1.msra.mxu0 0.0
        %1961 = vmatprep.subr.mxu0 0.0
        %1962 = vmatpush1.msra.mxu0 0.0
        %1963 = vmatprep.mubr.f32.mxu0 0.0
        %1964 = vmatmul.mubr.f32.gmra.mrb[0].mxu0 %v1891
        %v1965 = vpop.f32.mrb[0].mxu0
        %v1966 = vadd.f32 0.0, %v1965
        %v1967 = vpop.f32.mrb[0].mxu0
        %v1968 = vadd.f32 0.0, %v1967
        %1969 = vmatprep.mubr.f32.mxu0 0.0
        %1970 = vmatmul.mubr.f32.gmra.mrb[0].mxu0 %v1894
        %v1971 = vpop.f32.mrb[0].mxu0
        %v1972 = vadd.f32 0.0, %v1971
        %v1973 = vpop.f32.mrb[0].mxu0
        %v1974 = vadd.f32 0.0, %v1973
        %1975 = vmatprep.mubr.f32.mxu0 0.0
        %1976 = vmatmul.mubr.f32.gmra.mrb[0].mxu0 %v1897
        %v1977 = vpop.f32.mrb[0].mxu0
        %v1978 = vadd.f32 0.0, %v1977
        %v1979 = vpop.f32.mrb[0].mxu0
        %v1980 = vadd.f32 0.0, %v1979
        %1981 = vdwg.mxu0
        %1982 = vmatprep.subr.mxu0 0.0
        %1983 = vmatpush1.msra.mxu0 %v1868
        %1984 = vmatprep.subr.mxu0 0.0
        %1985 = vmatpush1.msra.mxu0 %v1871
        %1986 = vmatprep.subr.mxu0 0.0
        %1987 = vmatpush1.msra.mxu0 %v1874
        %1988 = vmatprep.subr.mxu0 0.0
        %1989 = vmatpush1.msra.mxu0 %v1877
        %1990 = vmatprep.subr.mxu0 0.0
        %1991 = vmatpush1.msra.mxu0 0.0
        %1992 = vmatprep.subr.mxu0 0.0
        %1993 = vmatpush1.msra.mxu0 0.0
        %1994 = vmatprep.subr.mxu0 0.0
        %1995 = vmatpush1.msra.mxu0 0.0
        %1996 = vmatprep.subr.mxu0 0.0
        %1997 = vmatpush1.msra.mxu0 0.0
        %1998 = vmatprep.subr.mxu0 0.0
        %1999 = vmatpush1.msra.mxu0 0.0
        %2000 = vmatprep.subr.mxu0 0.0
        %2001 = vmatpush1.msra.mxu0 0.0
        %2002 = vmatprep.subr.mxu0 0.0
        %2003 = vmatpush1.msra.mxu0 0.0
        %2004 = vmatprep.subr.mxu0 0.0
        %2005 = vmatpush1.msra.mxu0 0.0
        %2006 = vmatprep.subr.mxu0 0.0
        %2007 = vmatpush1.msra.mxu0 0.0
        %2008 = vmatprep.subr.mxu0 0.0
        %2009 = vmatpush1.msra.mxu0 0.0
        %2010 = vmatprep.subr.mxu0 0.0
        %2011 = vmatpush1.msra.mxu0 0.0
        %2012 = vmatprep.subr.mxu0 0.0
        %2013 = vmatpush1.msra.mxu0 0.0
        %2014 = vmatprep.subr.mxu0 0.0
        %2015 = vmatpush1.msra.mxu0 0.0
        %2016 = vmatprep.subr.mxu0 0.0
        %2017 = vmatpush1.msra.mxu0 0.0
        %2018 = vmatprep.subr.mxu0 0.0
        %2019 = vmatpush1.msra.mxu0 0.0
        %2020 = vmatprep.subr.mxu0 0.0
        %2021 = vmatpush1.msra.mxu0 0.0
        %2022 = vmatprep.subr.mxu0 0.0
        %2023 = vmatpush1.msra.mxu0 0.0
        %2024 = vmatprep.subr.mxu0 0.0
        %2025 = vmatpush1.msra.mxu0 0.0
        %2026 = vmatprep.subr.mxu0 0.0
        %2027 = vmatpush1.msra.mxu0 0.0
        %2028 = vmatprep.subr.mxu0 0.0
        %2029 = vmatpush1.msra.mxu0 0.0
        %2030 = vmatprep.subr.mxu0 0.0
        %2031 = vmatpush1.msra.mxu0 0.0
        %2032 = vmatprep.subr.mxu0 0.0
        %2033 = vmatpush1.msra.mxu0 0.0
        %2034 = vmatprep.subr.mxu0 0.0
        %2035 = vmatpush1.msra.mxu0 0.0
        %2036 = vmatprep.subr.mxu0 0.0
        %2037 = vmatpush1.msra.mxu0 0.0
        %2038 = vmatprep.subr.mxu0 0.0
        %2039 = vmatpush1.msra.mxu0 0.0
        %2040 = vmatprep.subr.mxu0 0.0
        %2041 = vmatpush1.msra.mxu0 0.0
        %2042 = vmatprep.subr.mxu0 0.0
        %2043 = vmatpush1.msra.mxu0 0.0
        %2044 = vmatprep.subr.mxu0 0.0
        %2045 = vmatpush1.msra.mxu0 0.0
        %2046 = vmatprep.mubr.f32.mxu0 0.0
        %2047 = vmatmul.mubr.f32.gmra.mrb[0].mxu0 %v1891
        %v2048 = vpop.f32.mrb[0].mxu0
        %v2049 = vadd.f32 0.0, %v2048
        %v2050 = vpop.f32.mrb[0].mxu0
        %2051 = vmatprep.mubr.f32.mxu0 0.0
        %2052 = vmatmul.mubr.f32.gmra.mrb[0].mxu0 %v1894
        %v2053 = vpop.f32.mrb[0].mxu0
        %v2054 = vadd.f32 0.0, %v2053
        %v2055 = vpop.f32.mrb[0].mxu0
        %2056 = vmatprep.mubr.f32.mxu0 0.0
        %2057 = vmatmul.mubr.f32.gmra.mrb[0].mxu0 %v1897
        %v2058 = vpop.f32.mrb[0].mxu0
        %v2059 = vadd.f32 0.0, %v2058
        %v2060 = vpop.f32.mrb[0].mxu0
        %2061 = vdwg.mxu0
        %v2062 = vadd.f32 %v1820, %v1966
        %v2063 = vadd.f32 %v1821, %v1968
        %v2064 = vadd.f32 %v1822, %v2049
        %v2065 = vadd.f32 %v1823, %v1972
        %v2066 = vadd.f32 %v1824, %v1974
        %v2067 = vadd.f32 %v1825, %v2054
        %v2068 = vadd.f32 %v1826, %v1978
        %v2069 = vadd.f32 %v1827, %v1980
        %v2070 = vadd.f32 %v1828, %v2059
        %s2071 = scalar_lea.vmem [#allocation7], 168
        %v2072 = vld [vmem:[%s2071] sm:$0xff]
        %v2073 = vld [vmem:[%s2071 + $0x8] sm:$0xff]
        %v2074 = vld [vmem:[%s2071 + $0x10] sm:$0xff]
        %2075 = vrot.lane.b32.xlu0 %v423, 91
        %v2076 = vpop.permute.xlu0 %2075
        %2077 = vrot.lane.b32.xlu0 %v424, 91
        %v2078 = vpop.permute.xlu0 %2077
        %2079 = vrot.lane.b32.xlu0 %v425, 91
        %v2080 = vpop.permute.xlu0 %2079
        %2081 = vrot.lane.b32.xlu0 %v426, 91
        %v2082 = vpop.permute.xlu0 %2081
        %2083 = vrot.lane.b32.xlu0 %v427, 91
        %v2084 = vpop.permute.xlu0 %2083
        %2085 = vrot.lane.b32.xlu0 %v428, 91
        %v2086 = vpop.permute.xlu0 %2085
        %2087 = vrot.lane.b32.xlu0 %v429, 91
        %v2088 = vpop.permute.xlu0 %2087
        %2089 = vrot.lane.b32.xlu0 %v430, 91
        %v2090 = vpop.permute.xlu0 %2089
        %2091 = vrot.lane.b32.xlu0 %v431, 91
        %v2092 = vpop.permute.xlu0 %2091
        %2093 = vrot.lane.b32.xlu0 %v432, 91
        %v2094 = vpop.permute.xlu0 %2093
        %2095 = vrot.lane.b32.xlu0 %v433, 91
        %v2096 = vpop.permute.xlu0 %2095
        %2097 = vrot.lane.b32.xlu0 %v434, 91
        %v2098 = vpop.permute.xlu0 %2097
        %2099 = vrot.lane.b32.xlu0 %v435, 91
        %v2100 = vpop.permute.xlu0 %2099
        %2101 = vrot.lane.b32.xlu0 %v436, 91
        %v2102 = vpop.permute.xlu0 %2101
        %2103 = vrot.lane.b32.xlu0 %v437, 91
        %v2104 = vpop.permute.xlu0 %2103
        %2105 = vrot.lane.b32.xlu0 %v438, 91
        %v2106 = vpop.permute.xlu0 %2105
        %vm2107 = vcmask 744448
        %v2108 = vsel %vm2107, %v2076, %v2078
        %v2109 = vsel %vm2107, %v2078, %v2080
        %v2110 = vsel %vm2107, %v2080, %v2082
        %v2111 = vsel %vm2107, %v2084, %v2086
        %v2112 = vsel %vm2107, %v2086, %v2088
        %v2113 = vsel %vm2107, %v2088, %v2090
        %v2114 = vsel %vm2107, %v2092, %v2094
        %v2115 = vsel %vm2107, %v2094, %v2096
        %v2116 = vsel %vm2107, %v2096, %v2098
        %v2117 = vsel %vm2107, %v2100, %v2102
        %v2118 = vsel %vm2107, %v2102, %v2104
        %v2119 = vsel %vm2107, %v2104, %v2106
        %v2133 = vsel %vm516, %v2072, 0
        %v2136 = vsel %vm516, %v2073, 0
        %v2139 = vsel %vm516, %v2074, 0
        %2141 = vmatprep.subr.mxu0 %v2109
        %2142 = vmatpush1.msra.mxu0 %v2108
        %2143 = vmatprep.subr.mxu0 %v2112
        %2144 = vmatpush1.msra.mxu0 %v2111
        %2145 = vmatprep.subr.mxu0 %v2115
        %2146 = vmatpush1.msra.mxu0 %v2114
        %2147 = vmatprep.subr.mxu0 %v2118
        %2148 = vmatpush1.msra.mxu0 %v2117
        %2149 = vmatprep.subr.mxu0 0.0
        %2150 = vmatpush1.msra.mxu0 0.0
        %2151 = vmatprep.subr.mxu0 0.0
        %2152 = vmatpush1.msra.mxu0 0.0
        %2153 = vmatprep.subr.mxu0 0.0
        %2154 = vmatpush1.msra.mxu0 0.0
        %2155 = vmatprep.subr.mxu0 0.0
        %2156 = vmatpush1.msra.mxu0 0.0
        %2157 = vmatprep.subr.mxu0 0.0
        %2158 = vmatpush1.msra.mxu0 0.0
        %2159 = vmatprep.subr.mxu0 0.0
        %2160 = vmatpush1.msra.mxu0 0.0
        %2161 = vmatprep.subr.mxu0 0.0
        %2162 = vmatpush1.msra.mxu0 0.0
        %2163 = vmatprep.subr.mxu0 0.0
        %2164 = vmatpush1.msra.mxu0 0.0
        %2165 = vmatprep.subr.mxu0 0.0
        %2166 = vmatpush1.msra.mxu0 0.0
        %2167 = vmatprep.subr.mxu0 0.0
        %2168 = vmatpush1.msra.mxu0 0.0
        %2169 = vmatprep.subr.mxu0 0.0
        %2170 = vmatpush1.msra.mxu0 0.0
        %2171 = vmatprep.subr.mxu0 0.0
        %2172 = vmatpush1.msra.mxu0 0.0
        %2173 = vmatprep.subr.mxu0 0.0
        %2174 = vmatpush1.msra.mxu0 0.0
        %2175 = vmatprep.subr.mxu0 0.0
        %2176 = vmatpush1.msra.mxu0 0.0
        %2177 = vmatprep.subr.mxu0 0.0
        %2178 = vmatpush1.msra.mxu0 0.0
        %2179 = vmatprep.subr.mxu0 0.0
        %2180 = vmatpush1.msra.mxu0 0.0
        %2181 = vmatprep.subr.mxu0 0.0
        %2182 = vmatpush1.msra.mxu0 0.0
        %2183 = vmatprep.subr.mxu0 0.0
        %2184 = vmatpush1.msra.mxu0 0.0
        %2185 = vmatprep.subr.mxu0 0.0
        %2186 = vmatpush1.msra.mxu0 0.0
        %2187 = vmatprep.subr.mxu0 0.0
        %2188 = vmatpush1.msra.mxu0 0.0
        %2189 = vmatprep.subr.mxu0 0.0
        %2190 = vmatpush1.msra.mxu0 0.0
        %2191 = vmatprep.subr.mxu0 0.0
        %2192 = vmatpush1.msra.mxu0 0.0
        %2193 = vmatprep.subr.mxu0 0.0
        %2194 = vmatpush1.msra.mxu0 0.0
        %2195 = vmatprep.subr.mxu0 0.0
        %2196 = vmatpush1.msra.mxu0 0.0
        %2197 = vmatprep.subr.mxu0 0.0
        %2198 = vmatpush1.msra.mxu0 0.0
        %2199 = vmatprep.subr.mxu0 0.0
        %2200 = vmatpush1.msra.mxu0 0.0
        %2201 = vmatprep.subr.mxu0 0.0
        %2202 = vmatpush1.msra.mxu0 0.0
        %2203 = vmatprep.subr.mxu0 0.0
        %2204 = vmatpush1.msra.mxu0 0.0
        %2205 = vmatprep.mubr.f32.mxu0 0.0
        %2206 = vmatmul.mubr.f32.gmra.mrb[0].mxu0 %v2133
        %v2207 = vpop.f32.mrb[0].mxu0
        %v2208 = vadd.f32 0.0, %v2207
        %v2209 = vpop.f32.mrb[0].mxu0
        %v2210 = vadd.f32 0.0, %v2209
        %2211 = vmatprep.mubr.f32.mxu0 0.0
        %2212 = vmatmul.mubr.f32.gmra.mrb[0].mxu0 %v2136
        %v2213 = vpop.f32.mrb[0].mxu0
        %v2214 = vadd.f32 0.0, %v2213
        %v2215 = vpop.f32.mrb[0].mxu0
        %v2216 = vadd.f32 0.0, %v2215
        %2217 = vmatprep.mubr.f32.mxu0 0.0
        %2218 = vmatmul.mubr.f32.gmra.mrb[0].mxu0 %v2139
        %v2219 = vpop.f32.mrb[0].mxu0
        %v2220 = vadd.f32 0.0, %v2219
        %v2221 = vpop.f32.mrb[0].mxu0
        %v2222 = vadd.f32 0.0, %v2221
        %2223 = vdwg.mxu0
        %2224 = vmatprep.subr.mxu0 0.0
        %2225 = vmatpush1.msra.mxu0 %v2110
        %2226 = vmatprep.subr.mxu0 0.0
        %2227 = vmatpush1.msra.mxu0 %v2113
        %2228 = vmatprep.subr.mxu0 0.0
        %2229 = vmatpush1.msra.mxu0 %v2116
        %2230 = vmatprep.subr.mxu0 0.0
        %2231 = vmatpush1.msra.mxu0 %v2119
        %2232 = vmatprep.subr.mxu0 0.0
        %2233 = vmatpush1.msra.mxu0 0.0
        %2234 = vmatprep.subr.mxu0 0.0
        %2235 = vmatpush1.msra.mxu0 0.0
        %2236 = vmatprep.subr.mxu0 0.0
        %2237 = vmatpush1.msra.mxu0 0.0
        %2238 = vmatprep.subr.mxu0 0.0
        %2239 = vmatpush1.msra.mxu0 0.0
        %2240 = vmatprep.subr.mxu0 0.0
        %2241 = vmatpush1.msra.mxu0 0.0
        %2242 = vmatprep.subr.mxu0 0.0
        %2243 = vmatpush1.msra.mxu0 0.0
        %2244 = vmatprep.subr.mxu0 0.0
        %2245 = vmatpush1.msra.mxu0 0.0
        %2246 = vmatprep.subr.mxu0 0.0
        %2247 = vmatpush1.msra.mxu0 0.0
        %2248 = vmatprep.subr.mxu0 0.0
        %2249 = vmatpush1.msra.mxu0 0.0
        %2250 = vmatprep.subr.mxu0 0.0
        %2251 = vmatpush1.msra.mxu0 0.0
        %2252 = vmatprep.subr.mxu0 0.0
        %2253 = vmatpush1.msra.mxu0 0.0
        %2254 = vmatprep.subr.mxu0 0.0
        %2255 = vmatpush1.msra.mxu0 0.0
        %2256 = vmatprep.subr.mxu0 0.0
        %2257 = vmatpush1.msra.mxu0 0.0
        %2258 = vmatprep.subr.mxu0 0.0
        %2259 = vmatpush1.msra.mxu0 0.0
        %2260 = vmatprep.subr.mxu0 0.0
        %2261 = vmatpush1.msra.mxu0 0.0
        %2262 = vmatprep.subr.mxu0 0.0
        %2263 = vmatpush1.msra.mxu0 0.0
        %2264 = vmatprep.subr.mxu0 0.0
        %2265 = vmatpush1.msra.mxu0 0.0
        %2266 = vmatprep.subr.mxu0 0.0
        %2267 = vmatpush1.msra.mxu0 0.0
        %2268 = vmatprep.subr.mxu0 0.0
        %2269 = vmatpush1.msra.mxu0 0.0
        %2270 = vmatprep.subr.mxu0 0.0
        %2271 = vmatpush1.msra.mxu0 0.0
        %2272 = vmatprep.subr.mxu0 0.0
        %2273 = vmatpush1.msra.mxu0 0.0
        %2274 = vmatprep.subr.mxu0 0.0
        %2275 = vmatpush1.msra.mxu0 0.0
        %2276 = vmatprep.subr.mxu0 0.0
        %2277 = vmatpush1.msra.mxu0 0.0
        %2278 = vmatprep.subr.mxu0 0.0
        %2279 = vmatpush1.msra.mxu0 0.0
        %2280 = vmatprep.subr.mxu0 0.0
        %2281 = vmatpush1.msra.mxu0 0.0
        %2282 = vmatprep.subr.mxu0 0.0
        %2283 = vmatpush1.msra.mxu0 0.0
        %2284 = vmatprep.subr.mxu0 0.0
        %2285 = vmatpush1.msra.mxu0 0.0
        %2286 = vmatprep.subr.mxu0 0.0
        %2287 = vmatpush1.msra.mxu0 0.0
        %2288 = vmatprep.mubr.f32.mxu0 0.0
        %2289 = vmatmul.mubr.f32.gmra.mrb[0].mxu0 %v2133
        %v2290 = vpop.f32.mrb[0].mxu0
        %v2291 = vadd.f32 0.0, %v2290
        %v2292 = vpop.f32.mrb[0].mxu0
        %2293 = vmatprep.mubr.f32.mxu0 0.0
        %2294 = vmatmul.mubr.f32.gmra.mrb[0].mxu0 %v2136
        %v2295 = vpop.f32.mrb[0].mxu0
        %v2296 = vadd.f32 0.0, %v2295
        %v2297 = vpop.f32.mrb[0].mxu0
        %2298 = vmatprep.mubr.f32.mxu0 0.0
        %2299 = vmatmul.mubr.f32.gmra.mrb[0].mxu0 %v2139
        %v2300 = vpop.f32.mrb[0].mxu0
        %v2301 = vadd.f32 0.0, %v2300
        %v2302 = vpop.f32.mrb[0].mxu0
        %2303 = vdwg.mxu0
        %v2304 = vadd.f32 %v2062, %v2208
        %v2305 = vadd.f32 %v2063, %v2210
        %v2306 = vadd.f32 %v2064, %v2291
        %v2307 = vadd.f32 %v2065, %v2214
        %v2308 = vadd.f32 %v2066, %v2216
        %v2309 = vadd.f32 %v2067, %v2296
        %v2310 = vadd.f32 %v2068, %v2220
        %v2311 = vadd.f32 %v2069, %v2222
        %v2312 = vadd.f32 %v2070, %v2301
        %s2313 = scalar_lea.vmem [#allocation7], 192
        %v2314 = vld [vmem:[%s2313] sm:$0xff]
        %v2315 = vld [vmem:[%s2313 + $0x8] sm:$0xff]
        %v2316 = vld [vmem:[%s2313 + $0x10] sm:$0xff]
        %2317 = vrot.lane.b32.xlu0 %v423, 90
        %v2318 = vpop.permute.xlu0 %2317
        %2319 = vrot.lane.b32.xlu0 %v424, 90
        %v2320 = vpop.permute.xlu0 %2319
        %2321 = vrot.lane.b32.xlu0 %v425, 90
        %v2322 = vpop.permute.xlu0 %2321
        %2323 = vrot.lane.b32.xlu0 %v426, 90
        %v2324 = vpop.permute.xlu0 %2323
        %2325 = vrot.lane.b32.xlu0 %v427, 90
        %v2326 = vpop.permute.xlu0 %2325
        %2327 = vrot.lane.b32.xlu0 %v428, 90
        %v2328 = vpop.permute.xlu0 %2327
        %2329 = vrot.lane.b32.xlu0 %v429, 90
        %v2330 = vpop.permute.xlu0 %2329
        %2331 = vrot.lane.b32.xlu0 %v430, 90
        %v2332 = vpop.permute.xlu0 %2331
        %2333 = vrot.lane.b32.xlu0 %v431, 90
        %v2334 = vpop.permute.xlu0 %2333
        %2335 = vrot.lane.b32.xlu0 %v432, 90
        %v2336 = vpop.permute.xlu0 %2335
        %2337 = vrot.lane.b32.xlu0 %v433, 90
        %v2338 = vpop.permute.xlu0 %2337
        %2339 = vrot.lane.b32.xlu0 %v434, 90
        %v2340 = vpop.permute.xlu0 %2339
        %2341 = vrot.lane.b32.xlu0 %v435, 90
        %v2342 = vpop.permute.xlu0 %2341
        %2343 = vrot.lane.b32.xlu0 %v436, 90
        %v2344 = vpop.permute.xlu0 %2343
        %2345 = vrot.lane.b32.xlu0 %v437, 90
        %v2346 = vpop.permute.xlu0 %2345
        %2347 = vrot.lane.b32.xlu0 %v438, 90
        %v2348 = vpop.permute.xlu0 %2347
        %vm2349 = vcmask 736256
        %v2350 = vsel %vm2349, %v2318, %v2320
        %v2351 = vsel %vm2349, %v2320, %v2322
        %v2352 = vsel %vm2349, %v2322, %v2324
        %v2353 = vsel %vm2349, %v2326, %v2328
        %v2354 = vsel %vm2349, %v2328, %v2330
        %v2355 = vsel %vm2349, %v2330, %v2332
        %v2356 = vsel %vm2349, %v2334, %v2336
        %v2357 = vsel %vm2349, %v2336, %v2338
        %v2358 = vsel %vm2349, %v2338, %v2340
        %v2359 = vsel %vm2349, %v2342, %v2344
        %v2360 = vsel %vm2349, %v2344, %v2346
        %v2361 = vsel %vm2349, %v2346, %v2348
        %v2375 = vsel %vm516, %v2314, 0
        %v2378 = vsel %vm516, %v2315, 0
        %v2381 = vsel %vm516, %v2316, 0
        %2383 = vmatprep.subr.mxu0 %v2351
        %2384 = vmatpush1.msra.mxu0 %v2350
        %2385 = vmatprep.subr.mxu0 %v2354
        %2386 = vmatpush1.msra.mxu0 %v2353
        %2387 = vmatprep.subr.mxu0 %v2357
        %2388 = vmatpush1.msra.mxu0 %v2356
        %2389 = vmatprep.subr.mxu0 %v2360
        %2390 = vmatpush1.msra.mxu0 %v2359
        %2391 = vmatprep.subr.mxu0 0.0
        %2392 = vmatpush1.msra.mxu0 0.0
        %2393 = vmatprep.subr.mxu0 0.0
        %2394 = vmatpush1.msra.mxu0 0.0
        %2395 = vmatprep.subr.mxu0 0.0
        %2396 = vmatpush1.msra.mxu0 0.0
        %2397 = vmatprep.subr.mxu0 0.0
        %2398 = vmatpush1.msra.mxu0 0.0
        %2399 = vmatprep.subr.mxu0 0.0
        %2400 = vmatpush1.msra.mxu0 0.0
        %2401 = vmatprep.subr.mxu0 0.0
        %2402 = vmatpush1.msra.mxu0 0.0
        %2403 = vmatprep.subr.mxu0 0.0
        %2404 = vmatpush1.msra.mxu0 0.0
        %2405 = vmatprep.subr.mxu0 0.0
        %2406 = vmatpush1.msra.mxu0 0.0
        %2407 = vmatprep.subr.mxu0 0.0
        %2408 = vmatpush1.msra.mxu0 0.0
        %2409 = vmatprep.subr.mxu0 0.0
        %2410 = vmatpush1.msra.mxu0 0.0
        %2411 = vmatprep.subr.mxu0 0.0
        %2412 = vmatpush1.msra.mxu0 0.0
        %2413 = vmatprep.subr.mxu0 0.0
        %2414 = vmatpush1.msra.mxu0 0.0
        %2415 = vmatprep.subr.mxu0 0.0
        %2416 = vmatpush1.msra.mxu0 0.0
        %2417 = vmatprep.subr.mxu0 0.0
        %2418 = vmatpush1.msra.mxu0 0.0
        %2419 = vmatprep.subr.mxu0 0.0
        %2420 = vmatpush1.msra.mxu0 0.0
        %2421 = vmatprep.subr.mxu0 0.0
        %2422 = vmatpush1.msra.mxu0 0.0
        %2423 = vmatprep.subr.mxu0 0.0
        %2424 = vmatpush1.msra.mxu0 0.0
        %2425 = vmatprep.subr.mxu0 0.0
        %2426 = vmatpush1.msra.mxu0 0.0
        %2427 = vmatprep.subr.mxu0 0.0
        %2428 = vmatpush1.msra.mxu0 0.0
        %2429 = vmatprep.subr.mxu0 0.0
        %2430 = vmatpush1.msra.mxu0 0.0
        %2431 = vmatprep.subr.mxu0 0.0
        %2432 = vmatpush1.msra.mxu0 0.0
        %2433 = vmatprep.subr.mxu0 0.0
        %2434 = vmatpush1.msra.mxu0 0.0
        %2435 = vmatprep.subr.mxu0 0.0
        %2436 = vmatpush1.msra.mxu0 0.0
        %2437 = vmatprep.subr.mxu0 0.0
        %2438 = vmatpush1.msra.mxu0 0.0
        %2439 = vmatprep.subr.mxu0 0.0
        %2440 = vmatpush1.msra.mxu0 0.0
        %2441 = vmatprep.subr.mxu0 0.0
        %2442 = vmatpush1.msra.mxu0 0.0
        %2443 = vmatprep.subr.mxu0 0.0
        %2444 = vmatpush1.msra.mxu0 0.0
        %2445 = vmatprep.subr.mxu0 0.0
        %2446 = vmatpush1.msra.mxu0 0.0
        %2447 = vmatprep.mubr.f32.mxu0 0.0
        %2448 = vmatmul.mubr.f32.gmra.mrb[0].mxu0 %v2375
        %v2449 = vpop.f32.mrb[0].mxu0
        %v2450 = vadd.f32 0.0, %v2449
        %v2451 = vpop.f32.mrb[0].mxu0
        %v2452 = vadd.f32 0.0, %v2451
        %2453 = vmatprep.mubr.f32.mxu0 0.0
        %2454 = vmatmul.mubr.f32.gmra.mrb[0].mxu0 %v2378
        %v2455 = vpop.f32.mrb[0].mxu0
        %v2456 = vadd.f32 0.0, %v2455
        %v2457 = vpop.f32.mrb[0].mxu0
        %v2458 = vadd.f32 0.0, %v2457
        %2459 = vmatprep.mubr.f32.mxu0 0.0
        %2460 = vmatmul.mubr.f32.gmra.mrb[0].mxu0 %v2381
        %v2461 = vpop.f32.mrb[0].mxu0
        %v2462 = vadd.f32 0.0, %v2461
        %v2463 = vpop.f32.mrb[0].mxu0
        %v2464 = vadd.f32 0.0, %v2463
        %2465 = vdwg.mxu0
        %2466 = vmatprep.subr.mxu0 0.0
        %2467 = vmatpush1.msra.mxu0 %v2352
        %2468 = vmatprep.subr.mxu0 0.0
        %2469 = vmatpush1.msra.mxu0 %v2355
        %2470 = vmatprep.subr.mxu0 0.0
        %2471 = vmatpush1.msra.mxu0 %v2358
        %2472 = vmatprep.subr.mxu0 0.0
        %2473 = vmatpush1.msra.mxu0 %v2361
        %2474 = vmatprep.subr.mxu0 0.0
        %2475 = vmatpush1.msra.mxu0 0.0
        %2476 = vmatprep.subr.mxu0 0.0
        %2477 = vmatpush1.msra.mxu0 0.0
        %2478 = vmatprep.subr.mxu0 0.0
        %2479 = vmatpush1.msra.mxu0 0.0
        %2480 = vmatprep.subr.mxu0 0.0
        %2481 = vmatpush1.msra.mxu0 0.0
        %2482 = vmatprep.subr.mxu0 0.0
        %2483 = vmatpush1.msra.mxu0 0.0
        %2484 = vmatprep.subr.mxu0 0.0
        %2485 = vmatpush1.msra.mxu0 0.0
        %2486 = vmatprep.subr.mxu0 0.0
        %2487 = vmatpush1.msra.mxu0 0.0
        %2488 = vmatprep.subr.mxu0 0.0
        %2489 = vmatpush1.msra.mxu0 0.0
        %2490 = vmatprep.subr.mxu0 0.0
        %2491 = vmatpush1.msra.mxu0 0.0
        %2492 = vmatprep.subr.mxu0 0.0
        %2493 = vmatpush1.msra.mxu0 0.0
        %2494 = vmatprep.subr.mxu0 0.0
        %2495 = vmatpush1.msra.mxu0 0.0
        %2496 = vmatprep.subr.mxu0 0.0
        %2497 = vmatpush1.msra.mxu0 0.0
        %2498 = vmatprep.subr.mxu0 0.0
        %2499 = vmatpush1.msra.mxu0 0.0
        %2500 = vmatprep.subr.mxu0 0.0
        %2501 = vmatpush1.msra.mxu0 0.0
        %2502 = vmatprep.subr.mxu0 0.0
        %2503 = vmatpush1.msra.mxu0 0.0
        %2504 = vmatprep.subr.mxu0 0.0
        %2505 = vmatpush1.msra.mxu0 0.0
        %2506 = vmatprep.subr.mxu0 0.0
        %2507 = vmatpush1.msra.mxu0 0.0
        %2508 = vmatprep.subr.mxu0 0.0
        %2509 = vmatpush1.msra.mxu0 0.0
        %2510 = vmatprep.subr.mxu0 0.0
        %2511 = vmatpush1.msra.mxu0 0.0
        %2512 = vmatprep.subr.mxu0 0.0
        %2513 = vmatpush1.msra.mxu0 0.0
        %2514 = vmatprep.subr.mxu0 0.0
        %2515 = vmatpush1.msra.mxu0 0.0
        %2516 = vmatprep.subr.mxu0 0.0
        %2517 = vmatpush1.msra.mxu0 0.0
        %2518 = vmatprep.subr.mxu0 0.0
        %2519 = vmatpush1.msra.mxu0 0.0
        %2520 = vmatprep.subr.mxu0 0.0
        %2521 = vmatpush1.msra.mxu0 0.0
        %2522 = vmatprep.subr.mxu0 0.0
        %2523 = vmatpush1.msra.mxu0 0.0
        %2524 = vmatprep.subr.mxu0 0.0
        %2525 = vmatpush1.msra.mxu0 0.0
        %2526 = vmatprep.subr.mxu0 0.0
        %2527 = vmatpush1.msra.mxu0 0.0
        %2528 = vmatprep.subr.mxu0 0.0
        %2529 = vmatpush1.msra.mxu0 0.0
        %2530 = vmatprep.mubr.f32.mxu0 0.0
        %2531 = vmatmul.mubr.f32.gmra.mrb[0].mxu0 %v2375
        %v2532 = vpop.f32.mrb[0].mxu0
        %v2533 = vadd.f32 0.0, %v2532
        %v2534 = vpop.f32.mrb[0].mxu0
        %2535 = vmatprep.mubr.f32.mxu0 0.0
        %2536 = vmatmul.mubr.f32.gmra.mrb[0].mxu0 %v2378
        %v2537 = vpop.f32.mrb[0].mxu0
        %v2538 = vadd.f32 0.0, %v2537
        %v2539 = vpop.f32.mrb[0].mxu0
        %2540 = vmatprep.mubr.f32.mxu0 0.0
        %2541 = vmatmul.mubr.f32.gmra.mrb[0].mxu0 %v2381
        %v2542 = vpop.f32.mrb[0].mxu0
        %v2543 = vadd.f32 0.0, %v2542
        %v2544 = vpop.f32.mrb[0].mxu0
        %2545 = vdwg.mxu0
        %v2546 = vadd.f32 %v2304, %v2450
        %v2547 = vadd.f32 %v2305, %v2452
        %v2548 = vadd.f32 %v2306, %v2533
        %v2549 = vadd.f32 %v2307, %v2456
        %v2550 = vadd.f32 %v2308, %v2458
        %v2551 = vadd.f32 %v2309, %v2538
        %v2552 = vadd.f32 %v2310, %v2462
        %v2553 = vadd.f32 %v2311, %v2464
        %v2554 = vadd.f32 %v2312, %v2543
        %v2555 = vld [vmem:[%s3] sm:$0xff]
        %v2556 = vld [vmem:[%s3 + $0x8] sm:$0xff]
        %v2557 = vld [vmem:[%s3 + $0x10] sm:$0xff]
        %2559 = vset.pattern.permute.xlu0 0
        %2560 = vperm.xlu0 %2559, %v2555
        %v2561 = vpop.permute.xlu0 %2560
        %2564 = vset.pattern.permute.xlu0 0
        %2565 = vperm.xlu0 %2564, %v2556
        %v2566 = vpop.permute.xlu0 %2565
        %2569 = vset.pattern.permute.xlu0 0
        %2570 = vperm.xlu0 %2569, %v2557
        %v2571 = vpop.permute.xlu0 %2570
        %v2573 = vadd.f32 %v2546, %v2561
        %v2574 = vadd.f32 %v2547, %v2561
        %v2575 = vadd.f32 %v2548, %v2561
        %v2576 = vadd.f32 %v2549, %v2566
        %v2577 = vadd.f32 %v2550, %v2566
        %v2578 = vadd.f32 %v2551, %v2566
        %v2579 = vadd.f32 %v2552, %v2571
        %v2580 = vadd.f32 %v2553, %v2571
        %v2581 = vadd.f32 %v2554, %v2571
        %v2582 = vmax.f32 %v2573, 0.0
        %v2583 = vmax.f32 %v2574, 0.0
        %v2584 = vmax.f32 %v2575, 0.0
        %v2585 = vmax.f32 %v2576, 0.0
        %v2586 = vmax.f32 %v2577, 0.0
        %v2587 = vmax.f32 %v2578, 0.0
        %v2588 = vmax.f32 %v2579, 0.0
        %v2589 = vmax.f32 %v2580, 0.0
        %v2590 = vmax.f32 %v2581, 0.0
        %v2591 = vld [vmem:[%s4] sm:$0x1f]
        %v2592 = vld [vmem:[%s5] sm:$0x1f]
        %2594 = vset.pattern.permute.xlu0 0
        %2595 = vperm.xlu0 %2594, %v2592
        %v2596 = vpop.permute.xlu0 %2595
        %vm2598 = vcmask 195584
        %v2600 = vsel %vm2598, %v2591, 0
        %2602 = vmatprep.subr.mxu0 %v2583
        %2603 = vmatpush1.msra.mxu0 %v2582
        %2604 = vmatprep.subr.mxu0 %v2586
        %2605 = vmatpush1.msra.mxu0 %v2585
        %2606 = vmatprep.subr.mxu0 %v2589
        %2607 = vmatpush1.msra.mxu0 %v2588
        %2608 = vmatprep.subr.mxu0 0.0
        %2609 = vmatpush1.msra.mxu0 0.0
        %2610 = vmatprep.subr.mxu0 0.0
        %2611 = vmatpush1.msra.mxu0 0.0
        %2612 = vmatprep.subr.mxu0 0.0
        %2613 = vmatpush1.msra.mxu0 0.0
        %2614 = vmatprep.subr.mxu0 0.0
        %2615 = vmatpush1.msra.mxu0 0.0
        %2616 = vmatprep.subr.mxu0 0.0
        %2617 = vmatpush1.msra.mxu0 0.0
        %2618 = vmatprep.subr.mxu0 0.0
        %2619 = vmatpush1.msra.mxu0 0.0
        %2620 = vmatprep.subr.mxu0 0.0
        %2621 = vmatpush1.msra.mxu0 0.0
        %2622 = vmatprep.subr.mxu0 0.0
        %2623 = vmatpush1.msra.mxu0 0.0
        %2624 = vmatprep.subr.mxu0 0.0
        %2625 = vmatpush1.msra.mxu0 0.0
        %2626 = vmatprep.subr.mxu0 0.0
        %2627 = vmatpush1.msra.mxu0 0.0
        %2628 = vmatprep.subr.mxu0 0.0
        %2629 = vmatpush1.msra.mxu0 0.0
        %2630 = vmatprep.subr.mxu0 0.0
        %2631 = vmatpush1.msra.mxu0 0.0
        %2632 = vmatprep.subr.mxu0 0.0
        %2633 = vmatpush1.msra.mxu0 0.0
        %2634 = vmatprep.subr.mxu0 0.0
        %2635 = vmatpush1.msra.mxu0 0.0
        %2636 = vmatprep.subr.mxu0 0.0
        %2637 = vmatpush1.msra.mxu0 0.0
        %2638 = vmatprep.subr.mxu0 0.0
        %2639 = vmatpush1.msra.mxu0 0.0
        %2640 = vmatprep.subr.mxu0 0.0
        %2641 = vmatpush1.msra.mxu0 0.0
        %2642 = vmatprep.subr.mxu0 0.0
        %2643 = vmatpush1.msra.mxu0 0.0
        %2644 = vmatprep.subr.mxu0 0.0
        %2645 = vmatpush1.msra.mxu0 0.0
        %2646 = vmatprep.subr.mxu0 0.0
        %2647 = vmatpush1.msra.mxu0 0.0
        %2648 = vmatprep.subr.mxu0 0.0
        %2649 = vmatpush1.msra.mxu0 0.0
        %2650 = vmatprep.subr.mxu0 0.0
        %2651 = vmatpush1.msra.mxu0 0.0
        %2652 = vmatprep.subr.mxu0 0.0
        %2653 = vmatpush1.msra.mxu0 0.0
        %2654 = vmatprep.subr.mxu0 0.0
        %2655 = vmatpush1.msra.mxu0 0.0
        %2656 = vmatprep.subr.mxu0 0.0
        %2657 = vmatpush1.msra.mxu0 0.0
        %2658 = vmatprep.subr.mxu0 0.0
        %2659 = vmatpush1.msra.mxu0 0.0
        %2660 = vmatprep.subr.mxu0 0.0
        %2661 = vmatpush1.msra.mxu0 0.0
        %2662 = vmatprep.subr.mxu0 0.0
        %2663 = vmatpush1.msra.mxu0 0.0
        %2664 = vmatprep.subr.mxu0 0.0
        %2665 = vmatpush1.msra.mxu0 0.0
        %2666 = vmatprep.mubr.f32.mxu0 0.0
        %2667 = vmatmul.mubr.f32.gmra.mrb[0].mxu0 %v2600
        %v2668 = vpop.f32.mrb[0].mxu0
        %v2669 = vadd.f32 %v2596, %v2668
        %v2670 = vpop.f32.mrb[0].mxu0
        %v2671 = vadd.f32 %v2596, %v2670
        %2672 = vdwg.mxu0
        %2673 = vmatprep.subr.mxu0 0.0
        %2674 = vmatpush1.msra.mxu0 %v2584
        %2675 = vmatprep.subr.mxu0 0.0
        %2676 = vmatpush1.msra.mxu0 %v2587
        %2677 = vmatprep.subr.mxu0 0.0
        %2678 = vmatpush1.msra.mxu0 %v2590
        %2679 = vmatprep.subr.mxu0 0.0
        %2680 = vmatpush1.msra.mxu0 0.0
        %2681 = vmatprep.subr.mxu0 0.0
        %2682 = vmatpush1.msra.mxu0 0.0
        %2683 = vmatprep.subr.mxu0 0.0
        %2684 = vmatpush1.msra.mxu0 0.0
        %2685 = vmatprep.subr.mxu0 0.0
        %2686 = vmatpush1.msra.mxu0 0.0
        %2687 = vmatprep.subr.mxu0 0.0
        %2688 = vmatpush1.msra.mxu0 0.0
        %2689 = vmatprep.subr.mxu0 0.0
        %2690 = vmatpush1.msra.mxu0 0.0
        %2691 = vmatprep.subr.mxu0 0.0
        %2692 = vmatpush1.msra.mxu0 0.0
        %2693 = vmatprep.subr.mxu0 0.0
        %2694 = vmatpush1.msra.mxu0 0.0
        %2695 = vmatprep.subr.mxu0 0.0
        %2696 = vmatpush1.msra.mxu0 0.0
        %2697 = vmatprep.subr.mxu0 0.0
        %2698 = vmatpush1.msra.mxu0 0.0
        %2699 = vmatprep.subr.mxu0 0.0
        %2700 = vmatpush1.msra.mxu0 0.0
        %2701 = vmatprep.subr.mxu0 0.0
        %2702 = vmatpush1.msra.mxu0 0.0
        %2703 = vmatprep.subr.mxu0 0.0
        %2704 = vmatpush1.msra.mxu0 0.0
        %2705 = vmatprep.subr.mxu0 0.0
        %2706 = vmatpush1.msra.mxu0 0.0
        %2707 = vmatprep.subr.mxu0 0.0
        %2708 = vmatpush1.msra.mxu0 0.0
        %2709 = vmatprep.subr.mxu0 0.0
        %2710 = vmatpush1.msra.mxu0 0.0
        %2711 = vmatprep.subr.mxu0 0.0
        %2712 = vmatpush1.msra.mxu0 0.0
        %2713 = vmatprep.subr.mxu0 0.0
        %2714 = vmatpush1.msra.mxu0 0.0
        %2715 = vmatprep.subr.mxu0 0.0
        %2716 = vmatpush1.msra.mxu0 0.0
        %2717 = vmatprep.subr.mxu0 0.0
        %2718 = vmatpush1.msra.mxu0 0.0
        %2719 = vmatprep.subr.mxu0 0.0
        %2720 = vmatpush1.msra.mxu0 0.0
        %2721 = vmatprep.subr.mxu0 0.0
        %2722 = vmatpush1.msra.mxu0 0.0
        %2723 = vmatprep.subr.mxu0 0.0
        %2724 = vmatpush1.msra.mxu0 0.0
        %2725 = vmatprep.subr.mxu0 0.0
        %2726 = vmatpush1.msra.mxu0 0.0
        %2727 = vmatprep.subr.mxu0 0.0
        %2728 = vmatpush1.msra.mxu0 0.0
        %2729 = vmatprep.subr.mxu0 0.0
        %2730 = vmatpush1.msra.mxu0 0.0
        %2731 = vmatprep.subr.mxu0 0.0
        %2732 = vmatpush1.msra.mxu0 0.0
        %2733 = vmatprep.subr.mxu0 0.0
        %2734 = vmatpush1.msra.mxu0 0.0
        %2735 = vmatprep.subr.mxu0 0.0
        %2736 = vmatpush1.msra.mxu0 0.0
        %2737 = vmatprep.mubr.f32.mxu0 0.0
        %2738 = vmatmul.mubr.f32.gmra.mrb[0].mxu0 %v2600
        %v2739 = vpop.f32.mrb[0].mxu0
        %v2740 = vadd.f32 %v2596, %v2739
        %v2741 = vpop.f32.mrb[0].mxu0
        %2742 = vdwg.mxu0
        %2743 = vst [vmem:[%s374] sm:$0x1f] %v2669
        %2744 = vst [vmem:[%s374 + $0x8] sm:$0x1f] %v2671
        %2745 = vst [vmem:[%s374 + $0x10] sm:$0x1f] %v2740
        %s2746 = smul.u32 3, %s28
        %p2747 = scmp.lt.s32.totalorder %s27, 1
        %s2748 = scalar_select %p2747, %s27, 1
        %p2749 = scmp.lt.s32.totalorder %s2746, 2
        %s2750 = scalar_select %p2749, %s2746, 2
        %s2751 = smul.addr %s2748, 3
        %s2752 = sadd.s32 %s2750, %s2751
        %s2753 = smul.addr %s2752, 8
        %s2754 = scalar_lea.vmem %s6, %s2753
        // Predicated region
        $region57: #{tpu_custom_call.1} parent=43 // pred_check
          %p2755 = pneg %p199
        $region58: #{tpu_custom_call.1} parent=43 // pred_check_branch
          %2757 = sbr.rel (%p2755) target = $region60
        $region59: #{tpu_custom_call.1} parent=43 // pred_region
          %s2758 = smul.u32 3, %s28
        $region60: #{tpu_custom_call.1} parent=43 // pred_fallthru
          _
      $region44: #{tpu_custom_call.1} parent=5 // pred_fallthru
        _
      %p2759 = scmp.le.s32.totalorder 2, %s18
      // Predicated region
      $region61: #{tpu_custom_call.1} parent=5 // pred_check
        %p2760 = pneg %p2759
      $region62: #{tpu_custom_call.1} parent=5 // pred_check_branch
        %2762 = sbr.rel (%p2760) target = $region64
      $region63: #{tpu_custom_call.1} parent=5 // pred_region
        %s2763 = ssub.s32 %s18, 2
        // Predicated region
        $region65: #{tpu_custom_call.1} parent=63 // pred_check
          %p2764 = pneg %p205
        $region66: #{tpu_custom_call.1} parent=63 // pred_check_branch
          %2766 = sbr.rel (%p2764) target = $region68
        $region67: #{tpu_custom_call.1} parent=63 // pred_region
          %s2767 = smul.u32 3, %s30
          %p2768 = scmp.lt.s32.totalorder %s29, 1
          %s2769 = scalar_select %p2768, %s29, 1
          %p2770 = scmp.lt.s32.totalorder %s2767, 2
          %s2771 = scalar_select %p2770, %s2767, 2
          %s2772 = smul.addr %s2769, 3
          %s2773 = sadd.s32 %s2771, %s2772
          %s2774 = smul.addr %s2773, 8
          %s2775 = scalar_lea.vmem %s6, %s2774
        $region68: #{tpu_custom_call.1} parent=63 // pred_fallthru
          _
      $region64: #{tpu_custom_call.1} parent=5 // pred_fallthru
        _
    $region6: #{tpu_custom_call.1} parent=1 // loop_footer
      %s22 = sadd.s32 1, %s18
    $region7: #{tpu_custom_call.1} parent=1 // loop_footer_branch
      %17 = sbr.rel target = $region3
    $region8: #{tpu_custom_call.1} parent=1 // loop_exit
      _
    %2776 = vsyncpa [#allocation4], 1
    %s2777 = scalar_lea.sflag [#allocation4], 1
    %2778 = vsyncpa %s2777, 1
    %2779 = vsyncpa [#allocation6], 1
    %s2780 = scalar_lea.sflag [#allocation6], 1
    %2781 = vsyncpa %s2780, 1

</llo_original>
